<compile_context>
chip_gen: v7x
topology: tpu7x:2x2x1
jax: 0.10.0
libtpu: 0.0.40
codegen_flags: <defaults>
</compile_context>

<pallas_src>
import math

import jax
import jax.numpy as jnp
from jax.experimental import pallas as pl
from jax.experimental.pallas import tpu as pltpu


# -----------------------------------------------------------------------------
# Helpers
# -----------------------------------------------------------------------------
def _round_up(x, m):
    return ((x + m - 1) // m) * m


def _vmem_limit_bytes():
    """Generation-aware scoped-VMEM limit (headroom left for Mosaic scratch)."""
    try:
        cap = pltpu.get_tpu_info().vmem_capacity_bytes
    except Exception:
        cap = 128 * 1024 * 1024
    if cap <= 64 * 1024 * 1024:          # v7x-class (64 MiB physical per core)
        return 48 * 1024 * 1024
    return 64 * 1024 * 1024              # v5e / v6e (128 MiB physical)


def _pick_out_row_tile(H, W, Cin, Cout, flatten_out, budget_bytes):
    """Largest valid divisor of H//2 whose per-step VMEM working set fits.

    Counts the tile-independent residents (double-buffered whole-image bf16
    input block with 128-lane padding, bf16 weights, f32 affine) plus the
    per-step staging values, matmul result and double-buffered output block.
    """
    Ho, Wo = H // 2, W // 2
    li = _round_up(Cin, 128)
    lk = _round_up(9 * Cin, 128)
    lo = _round_up(Cout, 128)

    fixed = 2 * H * _round_up(W, 16) * li * 2            # input image block (bf16, x2)
    fixed += 2 * _round_up(9 * Cin, 16) * lo * 2         # weights (bf16, x2)
    fixed += 2 * 2 * 8 * lo * 4                          # scale + shift (f32, x2)

    def step_bytes(tro):
        tri = 2 * tro
        m = tri * W
        b = 3 * (tri + 2) * _round_up(W, 16) * li * 2    # xc / xl / xr staging (bf16)
        b += _round_up(m, 16) * lk * 2                   # concatenated im2col operand (bf16)
        b += 2 * _round_up(m, 8) * lo * 4                # f32 matmul result + BN/ReLU temp
        if flatten_out:
            b += 2 * _round_up(tro, 16) * _round_up(Wo * Cout, 128) * 2
        else:
            b += 2 * tro * _round_up(Wo, 16) * lo * 2
        return b

    valid = [t for t in range(1, Ho + 1)
             if Ho % t == 0 and (not flatten_out or t % 8 == 0 or t == Ho)]
    best = valid[0]
    for t in valid:
        if fixed + step_bytes(t) <= budget_bytes:
            best = max(best, t)
    return best


def _pick_seq_tile(S, cap=512):
    """Projection row tile: divisor of S, multiple of 8 (or S itself)."""
    if S <= cap:
        return S
    for t in range(cap, 0, -1):
        if S % t == 0 and t % 8 == 0:
            return t
    return S


# -----------------------------------------------------------------------------
# Kernel 1: Conv2d(3x3, pad=1) + folded BatchNorm affine + ReLU + MaxPool(2,2)
#
# grid = (image, output-row-tile).  The (bf16) image block stays resident
# across the row-tile axis.  Each step assembles the vertically-haloed row
# window and the three horizontal shifts as *values* (zero rows / columns at
# the borders), concatenates the 9 taps along K, and runs a single MXU matmul
# with K = 9*Cin, followed by f32 BN affine + ReLU + 2x2 maxpool.
# -----------------------------------------------------------------------------
def _make_conv_kernel(H, W, Cin, Cout, TRo, n_rt, flatten_out):
    TRi = 2 * TRo           # unpooled conv rows produced per step
    Wo = W // 2
    M = TRi * W
    K = 9 * Cin

    def kernel(x_ref, w_ref, scale_ref, shift_ref, o_ref):
        # x_ref:     (1, H, W, Cin)   bf16, whole image (resident across row tiles)
        # w_ref:     (9*Cin, Cout)    bf16, taps ordered (dy, dx, cin)
        # scale_ref: (1, Cout)        f32   gamma / sqrt(running_var + eps)
        # shift_ref: (1, Cout)        f32   (conv_bias - running_mean)*scale + beta
        # o_ref:     (1, TRo, Wo*Cout) or (1, TRo, Wo, Cout), bf16
        rt = pl.program_id(1)
        r0 = rt * TRi

        # ---- vertically haloed window, assembled as a value (no slab scratch,
        #      no full-slab zeroing).  Border rows are zero via a select; the
        #      loads use clamped in-bounds indices.
        interior = x_ref[0, pl.ds(r0, TRi), :, :]                     # (TRi, W, Cin)
        top_row = x_ref[0, pl.ds(jnp.maximum(r0 - 1, 0), 1), :, :]
        bot_row = x_ref[0, pl.ds(jnp.minimum(r0 + TRi, H - 1), 1), :, :]
        top = jnp.where(rt > 0, top_row, jnp.zeros_like(top_row))
        bot = jnp.where(rt < n_rt - 1, bot_row, jnp.zeros_like(bot_row))
        xc = jnp.concatenate([top, interior, bot], axis=0)            # (TRi+2, W, Cin)

        # ---- horizontal shifts (dx = -1 / +1) with zero edge column; width
        #      stays exactly W so downstream reshapes are tile-aligned.
        zcol = jnp.zeros((TRi + 2, 1, Cin), xc.dtype)
        xl = jnp.concatenate([zcol, xc[:, :W - 1, :]], axis=1)        # x[.., c-1, ..]
        xr = jnp.concatenate([xc[:, 1:, :], zcol], axis=1)            # x[.., c+1, ..]

        # ---- 9 taps concatenated along K in registers, fed straight to the MXU
        taps = []
        for dy in range(3):
            taps.extend([xl[dy:dy + TRi], xc[dy:dy + TRi], xr[dy:dy + TRi]])
        col = jnp.concatenate(taps, axis=-1).astype(jnp.bfloat16)     # (TRi, W, 9*Cin)
        col = col.reshape(M, K)

        acc = jnp.dot(col, w_ref[...], preferred_element_type=jnp.float32)  # (M, Cout)

        # ---- folded conv-bias + BatchNorm (eval) affine + ReLU in f32
        y = jnp.maximum(acc * scale_ref[...] + shift_ref[...], 0.0)

        # ---- MaxPool 2x2 stride 2: row pool is a leading-dim select, only the
        #      column pool is a (tiny) sublane reduction.
        y = y.reshape(TRo, 2, Wo, 2, Cout)
        yh = jnp.maximum(y[:, 0], y[:, 1])                            # (TRo, Wo, 2, Cout)
        yp = jnp.max(yh, axis=2)                                      # (TRo, Wo, Cout)

        if flatten_out:
            o_ref[0] = yp.reshape(TRo, Wo * Cout).astype(o_ref.dtype)  # lane-dense store
        else:
            o_ref[0] = yp.astype(o_ref.dtype)

    return kernel


def conv3x3_bn_relu_pool(x, w, scale, shift):
    # x: (N, H, W, Cin) bf16 ; w: (3, 3, Cin, Cout) ; scale/shift: (Cout,)
    N, H, W, Cin = x.shape
    Cout = w.shape[-1]
    assert H % 2 == 0 and W % 2 == 0, "even spatial sizes required (MaxPool 2x2)"
    Ho, Wo = H // 2, W // 2

    flatten_out = (Cout % 128) != 0          # lane-dense stores for Cout < 128
    limit = _vmem_limit_bytes()
    TRo = _pick_out_row_tile(H, W, Cin, Cout, flatten_out,
                             budget_bytes=(limit * 3) // 5)
    n_rt = Ho // TRo

    wk = w.reshape(9 * Cin, Cout).astype(jnp.bfloat16)   # taps ordered (dy, dx, cin)
    scale2 = scale.reshape(1, Cout).astype(jnp.float32)
    shift2 = shift.reshape(1, Cout).astype(jnp.float32)

    kernel = _make_conv_kernel(H, W, Cin, Cout, TRo, n_rt, flatten_out)

    if flatten_out:
        out_shape = jax.ShapeDtypeStruct((N, Ho, Wo * Cout), jnp.bfloat16)
        out_spec = pl.BlockSpec((1, TRo, Wo * Cout), lambda n, r: (n, r, 0))
    else:
        out_shape = jax.ShapeDtypeStruct((N, Ho, Wo, Cout), jnp.bfloat16)
        out_spec = pl.BlockSpec((1, TRo, Wo, Cout), lambda n, r: (n, r, 0, 0))

    out = pl.pallas_call(
        kernel,
        out_shape=out_shape,
        grid=(N, n_rt),
        in_specs=[
            pl.BlockSpec((1, H, W, Cin), lambda n, r: (n, 0, 0, 0)),
            pl.BlockSpec((9 * Cin, Cout), lambda n, r: (0, 0)),
            pl.BlockSpec((1, Cout), lambda n, r: (0, 0)),
            pl.BlockSpec((1, Cout), lambda n, r: (0, 0)),
        ],
        out_specs=out_spec,
        compiler_params=pltpu.CompilerParams(
            dimension_semantics=("parallel", "parallel"),
            vmem_limit_bytes=limit,
        ),
    )(x.astype(jnp.bfloat16), wk, scale2, shift2)

    if flatten_out:
        out = out.reshape(N, Ho, Wo, Cout)   # free metadata reshape
    return out


# -----------------------------------------------------------------------------
# Kernel 2: PatchEmbedding linear projection fused with the temporal
# positional-encoding add.  (B, S) is flattened into a single row axis so the
# weight block stays resident; the projection bias is folded into the PE table;
# the d_model-wide output is written directly (no post-call slice pass).
# -----------------------------------------------------------------------------
def _proj_pe_kernel(x_ref, w_ref, pe_ref, o_ref):
    # x_ref: (tS, Cin) bf16 ; w_ref: (Cin, D) bf16 ; pe_ref: (tS, D) f32
    y = jnp.dot(x_ref[...], w_ref[...], preferred_element_type=jnp.float32)
    o_ref[...] = y + pe_ref[...]


def project_and_add_pe(x2, w, b, pe):
    # x2: (B*S, Cin) bf16 ; w: (Cin, D) ; b: (D,) ; pe: (S, D)
    BS, Cin = x2.shape
    S, D = pe.shape

    wb = w.astype(jnp.bfloat16)
    pe_b = (pe.astype(jnp.float32) + b.astype(jnp.float32)[None, :])   # bias folded

    tS = _pick_seq_tile(S)
    n_s = S // tS
    grid = (BS // tS,)       # = B * n_s; single parallel axis (good for megacore)

    return pl.pallas_call(
        _proj_pe_kernel,
        out_shape=jax.ShapeDtypeStruct((BS, D), jnp.float32),
        grid=grid,
        in_specs=[
            pl.BlockSpec((tS, Cin), lambda f: (f, 0)),
            pl.BlockSpec((Cin, D), lambda f: (0, 0)),        # resident across the grid
            pl.BlockSpec((tS, D), lambda f: (f % n_s, 0)),   # PE repeats per batch
        ],
        out_specs=pl.BlockSpec((tS, D), lambda f: (f, 0)),
        compiler_params=pltpu.CompilerParams(
            dimension_semantics=("parallel",),
            vmem_limit_bytes=_vmem_limit_bytes(),
        ),
    )(x2, wb, pe_b)


# -----------------------------------------------------------------------------
# Glue: parameter construction, sinusoidal PE, full forward pass.
# -----------------------------------------------------------------------------
def sinusoidal_pe(seq_len, d_model):
    pos = jnp.arange(seq_len, dtype=jnp.float32)[:, None]
    div = jnp.exp(jnp.arange(0, d_model, 2, dtype=jnp.float32)
                  * (-math.log(10000.0) / d_model))
    pe = jnp.zeros((seq_len, d_model), jnp.float32)
    pe = pe.at[:, 0::2].set(jnp.sin(pos * div))
    pe = pe.at[:, 1::2].set(jnp.cos(pos * div))
    return pe


def make_params(key, in_channels=3, hidden_dims=(64, 128, 256),
                d_model=100, eps=1e-5):
    params = {"conv_blocks": []}
    cin = in_channels
    for cout in hidden_dims:
        key, k_w, k_b, k_g, k_be = jax.random.split(key, 5)
        fan_in = cin * 9
        w = jax.random.normal(k_w, (3, 3, cin, cout), jnp.float32) / math.sqrt(fan_in)
        conv_b = jax.random.normal(k_b, (cout,), jnp.float32) * 0.05
        gamma = 1.0 + 0.1 * jax.random.normal(k_g, (cout,), jnp.float32)
        beta = 0.1 * jax.random.normal(k_be, (cout,), jnp.float32)
        running_mean = jnp.zeros((cout,), jnp.float32)   # PyTorch defaults
        running_var = jnp.ones((cout,), jnp.float32)
        scale = gamma / jnp.sqrt(running_var + eps)
        shift = (conv_b - running_mean) * scale + beta
        params["conv_blocks"].append((w, scale, shift))
        cin = cout
    key, k_pw, k_pb = jax.random.split(key, 3)
    params["proj_w"] = jax.random.normal(
        k_pw, (cin, d_model), jnp.float32) / math.sqrt(cin)
    params["proj_b"] = jax.random.normal(k_pb, (d_model,), jnp.float32) * 0.05
    params["d_model"] = d_model
    return params


def video_frame_embedding(video, params):
    # video: (B, n_frames, C, H, W)  -- PyTorch NCHW frame layout
    B, F, C, H, W = video.shape
    # NHWC + bf16 activations (matmul operands are bf16 anyway; BN/ReLU/pool f32)
    x = video.reshape(B * F, C, H, W).transpose(0, 2, 3, 1).astype(jnp.bfloat16)

    for (w, scale, shift) in params["conv_blocks"]:
        x = conv3x3_bn_relu_pool(x, w, scale, shift)

    N, Hn, Wn, Cf = x.shape                 # N = B * F
    S = F * Hn * Wn                         # tokens ordered (frame, h, w) per batch
    x2 = x.reshape(B * S, Cf)               # free metadata reshape

    pe = sinusoidal_pe(S, params["d_model"])
    out = project_and_add_pe(x2, params["proj_w"], params["proj_b"], pe)
    return out.reshape(B, S, params["d_model"])


if __name__ == "__main__":
    key = jax.random.PRNGKey(0)
    k_vid, k_par = jax.random.split(key)

    B, F, C, H, W = 2, 4, 3, 16, 16
    d_model = 100

    video = jax.random.normal(k_vid, (B, F, C, H, W), jnp.float32)
    params = make_params(k_par, in_channels=C, hidden_dims=(64, 128, 256),
                         d_model=d_model)

    out = video_frame_embedding(video, params)
    out = jax.block_until_ready(out)

    expected_seq = F * (H // 8) * (W // 8)
    assert out.shape == (B, expected_seq, d_model), out.shape
    assert bool(jnp.all(jnp.isfinite(out)))
    print("KERNEL_OK")
</pallas_src>

<mosaic_0001>
module attributes {stable_mosaic.version = 11 : i64} {
  func.func @kernel(%arg0: i32, %arg1: i32, %arg2: memref<1x16x16x3xbf16, #tpu.memory_space<vmem>>, %arg3: memref<27x64xbf16, #tpu.memory_space<vmem>>, %arg4: memref<1x64xf32, #tpu.memory_space<vmem>>, %arg5: memref<1x64xf32, #tpu.memory_space<vmem>>, %arg6: memref<1x8x512xbf16, #tpu.memory_space<vmem>>) attributes {dimension_semantics = [#tpu.dimension_semantics<parallel>, #tpu.dimension_semantics<parallel>], iteration_bounds = array<i64: 8, 1>, scalar_prefetch = 0 : i64, scratch_operands = 0 : i64, tpu.core_type = #tpu.core_type<tc>, window_params = [{transform_indices = @transform_0, window_bounds = array<i64: 1, 16, 16, 3>}, {pipeline_mode = #tpu.pipeline_mode<synchronous>, transform_indices = @transform_1, window_bounds = array<i64: 27, 64>}, {pipeline_mode = #tpu.pipeline_mode<synchronous>, transform_indices = @transform_2, window_bounds = array<i64: 1, 64>}, {pipeline_mode = #tpu.pipeline_mode<synchronous>, transform_indices = @transform_3, window_bounds = array<i64: 1, 64>}, {transform_indices = @transform_4, window_bounds = array<i64: 1, 8, 512>}]} {
    %c16_i32 = arith.constant 16 : i32
    %0 = arith.muli %arg1, %c16_i32 : i32
    %c0 = arith.constant 0 : index
    %1 = arith.index_cast %0 : i32 to index
    %c0_0 = arith.constant 0 : index
    %c0_1 = arith.constant 0 : index
    %2 = vector.load %arg2[%c0, %1, %c0_0, %c0_1] : memref<1x16x16x3xbf16, #tpu.memory_space<vmem>>, vector<1x16x16x3xbf16>
    %3 = vector.shape_cast %2 : vector<1x16x16x3xbf16> to vector<16x16x3xbf16>
    %c1_i32 = arith.constant 1 : i32
    %4 = arith.subi %0, %c1_i32 : i32
    %c0_i32 = arith.constant 0 : i32
    %5 = arith.maxsi %4, %c0_i32 : i32
    %c0_2 = arith.constant 0 : index
    %6 = arith.index_cast %5 : i32 to index
    %c0_3 = arith.constant 0 : index
    %c0_4 = arith.constant 0 : index
    %7 = vector.load %arg2[%c0_2, %6, %c0_3, %c0_4] : memref<1x16x16x3xbf16, #tpu.memory_space<vmem>>, vector<1x1x16x3xbf16>
    %8 = vector.shape_cast %7 : vector<1x1x16x3xbf16> to vector<1x16x3xbf16>
    %c16_i32_5 = arith.constant 16 : i32
    %9 = arith.addi %0, %c16_i32_5 : i32
    %c15_i32 = arith.constant 15 : i32
    %10 = arith.minsi %9, %c15_i32 : i32
    %c0_6 = arith.constant 0 : index
    %11 = arith.index_cast %10 : i32 to index
    %c0_7 = arith.constant 0 : index
    %c0_8 = arith.constant 0 : index
    %12 = vector.load %arg2[%c0_6, %11, %c0_7, %c0_8] : memref<1x16x16x3xbf16, #tpu.memory_space<vmem>>, vector<1x1x16x3xbf16>
    %13 = vector.shape_cast %12 : vector<1x1x16x3xbf16> to vector<1x16x3xbf16>
    %c0_i32_9 = arith.constant 0 : i32
    %14 = arith.cmpi sgt, %arg1, %c0_i32_9 : i32
    %cst = arith.constant 0.000000e+00 : bf16
    %15 = vector.broadcast %cst : bf16 to vector<1x16x3xbf16>
    %16 = arith.select %14, %8, %15 : vector<1x16x3xbf16>
    %c0_i32_10 = arith.constant 0 : i32
    %17 = arith.cmpi slt, %arg1, %c0_i32_10 : i32
    %cst_11 = arith.constant 0.000000e+00 : bf16
    %18 = vector.broadcast %cst_11 : bf16 to vector<1x16x3xbf16>
    %19 = arith.select %17, %13, %18 : vector<1x16x3xbf16>
    %20 = tpu.concatenate %16, %3, %19 in 0 : vector<1x16x3xbf16>, vector<16x16x3xbf16>, vector<1x16x3xbf16> -> vector<18x16x3xbf16>
    %cst_12 = arith.constant 0.000000e+00 : bf16
    %21 = vector.broadcast %cst_12 : bf16 to vector<18x1x3xbf16>
    %22 = vector.extract_strided_slice %20 {offsets = [0, 0, 0], sizes = [18, 15, 3], strides = [1, 1, 1]} : vector<18x16x3xbf16> to vector<18x15x3xbf16>
    %23 = tpu.concatenate %21, %22 in 1 : vector<18x1x3xbf16>, vector<18x15x3xbf16> -> vector<18x16x3xbf16>
    %24 = vector.extract_strided_slice %20 {offsets = [0, 1, 0], sizes = [18, 15, 3], strides = [1, 1, 1]} : vector<18x16x3xbf16> to vector<18x15x3xbf16>
    %25 = tpu.concatenate %24, %21 in 1 : vector<18x15x3xbf16>, vector<18x1x3xbf16> -> vector<18x16x3xbf16>
    %26 = vector.extract_strided_slice %23 {offsets = [0, 0, 0], sizes = [16, 16, 3], strides = [1, 1, 1]} : vector<18x16x3xbf16> to vector<16x16x3xbf16>
    %27 = vector.extract_strided_slice %20 {offsets = [0, 0, 0], sizes = [16, 16, 3], strides = [1, 1, 1]} : vector<18x16x3xbf16> to vector<16x16x3xbf16>
    %28 = vector.extract_strided_slice %25 {offsets = [0, 0, 0], sizes = [16, 16, 3], strides = [1, 1, 1]} : vector<18x16x3xbf16> to vector<16x16x3xbf16>
    %29 = vector.extract_strided_slice %23 {offsets = [1, 0, 0], sizes = [16, 16, 3], strides = [1, 1, 1]} : vector<18x16x3xbf16> to vector<16x16x3xbf16>
    %30 = vector.extract_strided_slice %20 {offsets = [1, 0, 0], sizes = [16, 16, 3], strides = [1, 1, 1]} : vector<18x16x3xbf16> to vector<16x16x3xbf16>
    %31 = vector.extract_strided_slice %25 {offsets = [1, 0, 0], sizes = [16, 16, 3], strides = [1, 1, 1]} : vector<18x16x3xbf16> to vector<16x16x3xbf16>
    %32 = vector.extract_strided_slice %23 {offsets = [2, 0, 0], sizes = [16, 16, 3], strides = [1, 1, 1]} : vector<18x16x3xbf16> to vector<16x16x3xbf16>
    %33 = vector.extract_strided_slice %20 {offsets = [2, 0, 0], sizes = [16, 16, 3], strides = [1, 1, 1]} : vector<18x16x3xbf16> to vector<16x16x3xbf16>
    %34 = vector.extract_strided_slice %25 {offsets = [2, 0, 0], sizes = [16, 16, 3], strides = [1, 1, 1]} : vector<18x16x3xbf16> to vector<16x16x3xbf16>
    %35 = tpu.concatenate %26, %27, %28, %29, %30, %31, %32, %33, %34 in 2 : vector<16x16x3xbf16>, vector<16x16x3xbf16>, vector<16x16x3xbf16>, vector<16x16x3xbf16>, vector<16x16x3xbf16>, vector<16x16x3xbf16>, vector<16x16x3xbf16>, vector<16x16x3xbf16>, vector<16x16x3xbf16> -> vector<16x16x27xbf16>
    %36 = vector.shape_cast %35 : vector<16x16x27xbf16> to vector<256x27xbf16>
    %c0_13 = arith.constant 0 : index
    %c0_14 = arith.constant 0 : index
    %37 = vector.load %arg3[%c0_13, %c0_14] : memref<27x64xbf16, #tpu.memory_space<vmem>>, vector<27x64xbf16>
    %cst_15 = arith.constant dense<0.000000e+00> : vector<256x64xf32>
    %38 = tpu.matmul %36, %37, %cst_15 {dimension_numbers = #tpu.dot_dimension_numbers<[1], [0], [0], [1], [0, 0, 1, 1], [], []>} : vector<256x27xbf16>, vector<27x64xbf16>, vector<256x64xf32> -> vector<256x64xf32>
    %c0_16 = arith.constant 0 : index
    %c0_17 = arith.constant 0 : index
    %39 = vector.load %arg4[%c0_16, %c0_17] : memref<1x64xf32, #tpu.memory_space<vmem>>, vector<1x64xf32>
    %40 = vector.broadcast %39 : vector<1x64xf32> to vector<256x64xf32>
    %41 = arith.mulf %38, %40 : vector<256x64xf32>
    %c0_18 = arith.constant 0 : index
    %c0_19 = arith.constant 0 : index
    %42 = vector.load %arg5[%c0_18, %c0_19] : memref<1x64xf32, #tpu.memory_space<vmem>>, vector<1x64xf32>
    %43 = vector.broadcast %42 : vector<1x64xf32> to vector<256x64xf32>
    %44 = arith.addf %41, %43 : vector<256x64xf32>
    %cst_20 = arith.constant 0.000000e+00 : f32
    %45 = vector.broadcast %cst_20 : f32 to vector<256x64xf32>
    %46 = arith.maximumf %44, %45 : vector<256x64xf32>
    %47 = vector.shape_cast %46 : vector<256x64xf32> to vector<8x2x8x2x64xf32>
    %48 = vector.extract_strided_slice %47 {offsets = [0, 0, 0, 0, 0], sizes = [8, 1, 8, 2, 64], strides = [1, 1, 1, 1, 1]} : vector<8x2x8x2x64xf32> to vector<8x1x8x2x64xf32>
    %49 = vector.shape_cast %48 : vector<8x1x8x2x64xf32> to vector<8x8x2x64xf32>
    %50 = vector.extract_strided_slice %47 {offsets = [0, 1, 0, 0, 0], sizes = [8, 1, 8, 2, 64], strides = [1, 1, 1, 1, 1]} : vector<8x2x8x2x64xf32> to vector<8x1x8x2x64xf32>
    %51 = vector.shape_cast %50 : vector<8x1x8x2x64xf32> to vector<8x8x2x64xf32>
    %52 = arith.maximumf %49, %51 : vector<8x8x2x64xf32>
    %cst_21 = arith.constant dense<0xFF800000> : vector<8x8x64xf32>
    %53 = vector.multi_reduction <maximumf>, %52, %cst_21 [2] : vector<8x8x2x64xf32> to vector<8x8x64xf32>
    %54 = vector.shape_cast %53 : vector<8x8x64xf32> to vector<8x512xf32>
    %55 = arith.truncf %54 : vector<8x512xf32> to vector<8x512xbf16>
    %c0_22 = arith.constant 0 : index
    %c0_23 = arith.constant 0 : index
    %c0_24 = arith.constant 0 : index
    %56 = vector.load %arg6[%c0_22, %c0_23, %c0_24] : memref<1x8x512xbf16, #tpu.memory_space<vmem>>, vector<1x8x512xbf16>
    %57 = vector.shape_cast %56 : vector<1x8x512xbf16> to vector<8x512xbf16>
    %58 = vector.shape_cast %55 : vector<8x512xbf16> to vector<1x8x512xbf16>
    tpu.vector_store %arg6[%c0_22, %c0_23, %c0_24], %58 {strides = array<i32>} : memref<1x8x512xbf16, #tpu.memory_space<vmem>>, vector<1x8x512xbf16>,
    return
  }
  func.func @transform_0(%arg0: i32, %arg1: i32) -> (i32, i32, i32, i32) {
    %c0_i32 = arith.constant 0 : i32
    %c0_i32_0 = arith.constant 0 : i32
    %c0_i32_1 = arith.constant 0 : i32
    %c0_i32_2 = arith.constant 0 : i32
    return %arg0, %c0_i32, %c0_i32_0, %c0_i32_1 : i32, i32, i32, i32
  }
  func.func @transform_1(%arg0: i32, %arg1: i32) -> (i32, i32) {
    %c0_i32 = arith.constant 0 : i32
    %c0_i32_0 = arith.constant 0 : i32
    %c0_i32_1 = arith.constant 0 : i32
    return %c0_i32, %c0_i32_0 : i32, i32
  }
  func.func @transform_2(%arg0: i32, %arg1: i32) -> (i32, i32) {
    %c0_i32 = arith.constant 0 : i32
    %c0_i32_0 = arith.constant 0 : i32
    %c0_i32_1 = arith.constant 0 : i32
    return %c0_i32, %c0_i32_0 : i32, i32
  }
  func.func @transform_3(%arg0: i32, %arg1: i32) -> (i32, i32) {
    %c0_i32 = arith.constant 0 : i32
    %c0_i32_0 = arith.constant 0 : i32
    %c0_i32_1 = arith.constant 0 : i32
    return %c0_i32, %c0_i32_0 : i32, i32
  }
  func.func @transform_4(%arg0: i32, %arg1: i32) -> (i32, i32, i32) {
    %c0_i32 = arith.constant 0 : i32
    %c0_i32_0 = arith.constant 0 : i32
    return %arg0, %arg1, %c0_i32 : i32, i32, i32
  }
}

</mosaic_0001>

<llo_original>
// kernel: tpu_custom_call.1
$region0: #{tpu_custom_call.1}
  #allocation0 [shape = 'u32[]', space=smem, size = 0x4, offset = 0x4, fixed_abs, tag = 'smem constant byte address 0x4 - core index']
  #allocation1 [shape = 'u32[144,128]{1,0:T(1,128)}', space=vmem, size = 0x12000, scoped, tag = 'internal scratch']
  %s0 = inlined_call_operand.hbm [shape: bf16[8,16,16,3], index: 0, kind: input, shape index: {}]
  %s1 = inlined_call_operand.hbm [shape: bf16[27,64], index: 1, kind: input, shape index: {}]
  %s2 = inlined_call_operand.hbm [shape: f32[1,64], index: 2, kind: input, shape index: {}]
  %s3 = inlined_call_operand.hbm [shape: f32[1,64], index: 3, kind: input, shape index: {}]
  %s4 = inlined_call_operand.hbm [shape: bf16[8,8,512], index: 4, kind: output, shape index: {}]
  %s5 = sld [smem:[#allocation0]]
  $region65: #{tpu_custom_call.1} parent=0
    _
  %s7 = ssub.s32 1, %s5
  %s8 = scalar_select 0, %s7, %s5
  $region1: #{tpu_custom_call.1} parent=0
    #allocation2 [shape = 'u8[131072]{0}', space=vmem, size = 0x20000, scoped, tag = 'input window, operand 0']
    #allocation3 [shape = 's32[2]{0}', space=sflag, size = 0x8, scoped, tag = 'scoped memory for tpu_custom_call.1']
    #allocation4 [shape = 's32[2]{0}', space=sflag, size = 0x8, scoped, tag = 'scoped memory for tpu_custom_call.1']
    #allocation5 [shape = 'u8[8192]{0}', space=vmem, size = 0x2000, scoped, tag = 'input window, operand 1, single buffered']
    #allocation6 [shape = 's32[1]{0}', space=sflag, size = 0x4, scoped, tag = 'scoped memory for tpu_custom_call.1']
    #allocation7 [shape = 'u8[512]{0}', space=vmem, size = 0x400, scoped, tag = 'input window, operand 2, single buffered']
    #allocation8 [shape = 'u8[512]{0}', space=vmem, size = 0x400, scoped, tag = 'input window, operand 3, single buffered']
    #allocation9 [shape = 's32[1]{0}', space=sflag, size = 0x4, scoped, tag = 'scoped memory for tpu_custom_call.1']
    #allocation10 [shape = 'u8[16384]{0}', space=vmem, size = 0x4000, scoped, tag = 'output window, operand 0']
    %9 = vsyncpa [#allocation3], 0
    %s10 = scalar_lea.sflag [#allocation3], 1
    %11 = vsyncpa %s10, 0
    %12 = vsyncpa [#allocation6], 0
    %13 = vsyncpa [#allocation9], 0
    %14 = vsyncpa [#allocation4], 0
    %s15 = scalar_lea.sflag [#allocation4], 1
    %16 = vsyncpa %s15, 0
    loop: start=0, step=1, limit=10
    $region2: #{tpu_custom_call.1} parent=1 // loop_pre_header
      _
    $region3: #{tpu_custom_call.1} parent=1 // loop_header
      %s18 = sphi 0, %s22
      %p19 = scmp.ge.s32.totalorder %s18, 10
      %s25 = sphi 0, %s37
      %s26 = sphi 0, %s33
      %s27 = sphi 0, %s25
      %s28 = sphi 0, %s26
      %s29 = sphi 0, %s27
      %s30 = sphi 0, %s28
      %s40 = sphi 0, %s42
      %s43 = sphi 0, %s40
      %s44 = sphi 0, %s43
      %s60 = sphi 0, %s44
      %s64 = sphi 0, %s64
      %s66 = sphi 0, %s64
      %s67 = sphi 0, %s66
      %s81 = sphi 0, %s67
      %s85 = sphi 0, %s85
      %s87 = sphi 0, %s85
      %s88 = sphi 0, %s87
      %s102 = sphi 0, %s88
      %s106 = sphi 0, %s106
      %s108 = sphi 0, %s106
      %s109 = sphi 0, %s108
      %s123 = sphi 0, %s109
      %s131 = sphi 0, %s133
      %s134 = sphi 0, %s131
      %s135 = sphi 0, %s134
      %s151 = sphi 0, %s135
    $region4: #{tpu_custom_call.1} parent=1 // loop_header_branch
      %21 = sbr.rel (%p19) target = $region8
    $region5: #{tpu_custom_call.1} parent=1 // loop_body
      %s23 = ssub.s32 %s18, 1
      %s24 = ssub.s32 %s18, 2
      %s31 = sadd.s32 1, %s26
      %p32 = scmp.ge.s32.totalorder %s31, 1
      %s33 = scalar_select %p32, 0, %s31
      %s34 = sadd.s32 1, %s25
      %s35 = scalar_select %p32, %s34, %s25
      %p36 = scmp.ge.s32.totalorder %s35, 8
      %s37 = scalar_select %p36, 0, %s35
      %s38 = ssub.s32 %s25, %s37
      %p39 = scmp.eq.s32.totalorder %s38, 0
      %s41 = sadd.s32 %s40, 1
      %s42 = scalar_select %p39, %s40, %s41
      %p45 = pneg %p39
      %p46 = scmp.eq.s32.totalorder %s18, 7
      %p47 = por %p45, %p46
      %p48 = scmp.ne.s32.totalorder %s40, %s43
      %p49 = scmp.eq.s32.totalorder %s18, 0
      %p50 = por %p48, %p49
      %p51 = scmp.ne.s32.totalorder %s40, %s43
      %p52 = scmp.eq.s32.totalorder %s23, 7
      %p53 = por %p51, %p52
      %p54 = scmp.ne.s32.totalorder %s43, %s44
      %p55 = scmp.eq.s32.totalorder %s23, 0
      %p56 = por %p54, %p55
      %p57 = scmp.ne.s32.totalorder %s43, %s44
      %p58 = scmp.eq.s32.totalorder %s24, 7
      %p59 = por %p57, %p58
      %p61 = scmp.ne.s32.totalorder %s44, %s60
      %p62 = scmp.eq.s32.totalorder %s24, 0
      %p63 = por %p61, %p62
      %s65 = sadd.s32 %s64, 1
      %p68 = scmp.eq.s32.totalorder %s18, 7
      %p69 = scmp.ne.s32.totalorder %s64, %s66
      %p70 = scmp.eq.s32.totalorder %s18, 0
      %p71 = por %p69, %p70
      %p72 = scmp.ne.s32.totalorder %s64, %s66
      %p73 = scmp.eq.s32.totalorder %s23, 7
      %p74 = por %p72, %p73
      %p75 = scmp.ne.s32.totalorder %s66, %s67
      %p76 = scmp.eq.s32.totalorder %s23, 0
      %p77 = por %p75, %p76
      %p78 = scmp.ne.s32.totalorder %s66, %s67
      %p79 = scmp.eq.s32.totalorder %s24, 7
      %p80 = por %p78, %p79
      %p82 = scmp.ne.s32.totalorder %s67, %s81
      %p83 = scmp.eq.s32.totalorder %s24, 0
      %p84 = por %p82, %p83
      %s86 = sadd.s32 %s85, 1
      %p89 = scmp.eq.s32.totalorder %s18, 7
      %p90 = scmp.ne.s32.totalorder %s85, %s87
      %p91 = scmp.eq.s32.totalorder %s18, 0
      %p92 = por %p90, %p91
      %p93 = scmp.ne.s32.totalorder %s85, %s87
      %p94 = scmp.eq.s32.totalorder %s23, 7
      %p95 = por %p93, %p94
      %p96 = scmp.ne.s32.totalorder %s87, %s88
      %p97 = scmp.eq.s32.totalorder %s23, 0
      %p98 = por %p96, %p97
      %p99 = scmp.ne.s32.totalorder %s87, %s88
      %p100 = scmp.eq.s32.totalorder %s24, 7
      %p101 = por %p99, %p100
      %p103 = scmp.ne.s32.totalorder %s88, %s102
      %p104 = scmp.eq.s32.totalorder %s24, 0
      %p105 = por %p103, %p104
      %s107 = sadd.s32 %s106, 1
      %p110 = scmp.eq.s32.totalorder %s18, 7
      %p111 = scmp.ne.s32.totalorder %s106, %s108
      %p112 = scmp.eq.s32.totalorder %s18, 0
      %p113 = por %p111, %p112
      %p114 = scmp.ne.s32.totalorder %s106, %s108
      %p115 = scmp.eq.s32.totalorder %s23, 7
      %p116 = por %p114, %p115
      %p117 = scmp.ne.s32.totalorder %s108, %s109
      %p118 = scmp.eq.s32.totalorder %s23, 0
      %p119 = por %p117, %p118
      %p120 = scmp.ne.s32.totalorder %s108, %s109
      %p121 = scmp.eq.s32.totalorder %s24, 7
      %p122 = por %p120, %p121
      %p124 = scmp.ne.s32.totalorder %s109, %s123
      %p125 = scmp.eq.s32.totalorder %s24, 0
      %p126 = por %p124, %p125
      %s127 = ssub.s32 %s25, %s37
      %s128 = ssub.s32 %s26, %s33
      %s129 = sor.u32 %s127, %s128
      %p130 = scmp.eq.s32.totalorder %s129, 0
      %s132 = sadd.s32 %s131, 1
      %s133 = scalar_select %p130, %s131, %s132
      %p136 = pneg %p130
      %p137 = scmp.eq.s32.totalorder %s18, 7
      %p138 = por %p136, %p137
      %p139 = scmp.ne.s32.totalorder %s131, %s134
      %p140 = scmp.eq.s32.totalorder %s18, 0
      %p141 = por %p139, %p140
      %p142 = scmp.ne.s32.totalorder %s131, %s134
      %p143 = scmp.eq.s32.totalorder %s23, 7
      %p144 = por %p142, %p143
      %p145 = scmp.ne.s32.totalorder %s134, %s135
      %p146 = scmp.eq.s32.totalorder %s23, 0
      %p147 = por %p145, %p146
      %p148 = scmp.ne.s32.totalorder %s134, %s135
      %p149 = scmp.eq.s32.totalorder %s24, 7
      %p150 = por %p148, %p149
      %p152 = scmp.ne.s32.totalorder %s135, %s151
      %p153 = scmp.eq.s32.totalorder %s24, 0
      %p154 = por %p152, %p153
      %p155 = scmp.le.s32.totalorder 1, %s18
      %p156 = scmp.lt.s32.totalorder %s18, 9
      %p157 = pnand %p155, %p156
      %p158 = pneg %p157
      // Predicated region
      $region9: #{tpu_custom_call.1} parent=5 // pred_check
        _
      $region10: #{tpu_custom_call.1} parent=5 // pred_check_branch
        %160 = sbr.rel (%p157) target = $region12
      $region11: #{tpu_custom_call.1} parent=5 // pred_region
        %s161 = ssub.s32 %s18, 1
        // Predicated region
        $region13: #{tpu_custom_call.1} parent=11 // pred_check
          %p162 = pneg %p77
        $region14: #{tpu_custom_call.1} parent=11 // pred_check_branch
          %164 = sbr.rel (%p162) target = $region16
        $region15: #{tpu_custom_call.1} parent=11 // pred_region
          %s166 = ssub.s32 256, 256
          %167 = vsyncadd [#allocation6], %s166
          %s168 = sshll.u32 [#allocation5], 4
          %s169 = int_to_ptr.vmem [resolvable:$true] %s168
          %174 = dma.hbm_to_vmem [thread:$0]  %s1, 256, %s169, [#allocation6], 64, 64, 4
        $region16: #{tpu_custom_call.1} parent=11 // pred_fallthru
          _
        // Predicated region
        $region17: #{tpu_custom_call.1} parent=11 // pred_check
          %p175 = pneg %p98
        $region18: #{tpu_custom_call.1} parent=11 // pred_check_branch
          %177 = sbr.rel (%p175) target = $region20
        $region19: #{tpu_custom_call.1} parent=11 // pred_region
          %s179 = ssub.s32 16, 16
          %180 = vsyncadd [#allocation6], %s179
          %s182 = sshll.u32 [#allocation7], 4
          %s183 = int_to_ptr.vmem [resolvable:$true] %s182
          %185 = dma.hbm_to_vmem [thread:$0]  %s2, 16, %s183, [#allocation6]
        $region20: #{tpu_custom_call.1} parent=11 // pred_fallthru
          _
        // Predicated region
        $region21: #{tpu_custom_call.1} parent=11 // pred_check
          %p186 = pneg %p119
        $region22: #{tpu_custom_call.1} parent=11 // pred_check_branch
          %188 = sbr.rel (%p186) target = $region24
        $region23: #{tpu_custom_call.1} parent=11 // pred_region
          %s190 = ssub.s32 16, 16
          %191 = vsyncadd [#allocation9], %s190
          %s193 = sshll.u32 [#allocation8], 4
          %s194 = int_to_ptr.vmem [resolvable:$true] %s193
          %196 = dma.hbm_to_vmem [thread:$0]  %s3, 16, %s194, [#allocation9]
        $region24: #{tpu_custom_call.1} parent=11 // pred_fallthru
          _
      $region12: #{tpu_custom_call.1} parent=5 // pred_fallthru
        _
      %p197 = scmp.lt.s32.totalorder %s18, 8
      // Predicated region
      $region25: #{tpu_custom_call.1} parent=5 // pred_check
        %p198 = pneg %p197
      $region26: #{tpu_custom_call.1} parent=5 // pred_check_branch
        %200 = sbr.rel (%p198) target = $region28
      $region27: #{tpu_custom_call.1} parent=5 // pred_region
        // Predicated region
        $region29: #{tpu_custom_call.1} parent=27 // pred_check
          %p201 = pneg %p50
        $region30: #{tpu_custom_call.1} parent=27 // pred_check_branch
          %203 = sbr.rel (%p201) target = $region32
        $region31: #{tpu_custom_call.1} parent=27 // pred_region
          %s204 = sand.u32 %s40, 1
          %s205 = scalar_lea.sflag [#allocation3], %s204
          %s206 = sand.u32 %s40, 1
          %s207 = smul.addr %s206, 128
          %s208 = scalar_lea.vmem [#allocation2], %s207
          %s210 = ssub.s32 2048, 2048
          %211 = vsyncadd %s205, %s210
          %s212 = smul.addr %s25, 32
          %s213 = smul.addr %s212, 64
          %s214 = scalar_lea.hbm %s0, %s213
          %s215 = sshll.u32 %s208, 4
          %s216 = int_to_ptr.vmem [resolvable:$true] %s215
          %221 = dma.hbm_to_vmem [thread:$0]  %s214, 2048, %s216, %s205, 64, 64, 4
        $region32: #{tpu_custom_call.1} parent=27 // pred_fallthru
          _
      $region28: #{tpu_custom_call.1} parent=5 // pred_fallthru
        _
      %p222 = scmp.le.s32.totalorder 1, %s18
      %p223 = scmp.lt.s32.totalorder %s18, 9
      %p224 = pnand %p222, %p223
      %p225 = pneg %p224
      // Predicated region
      $region33: #{tpu_custom_call.1} parent=5 // pred_check
        _
      $region34: #{tpu_custom_call.1} parent=5 // pred_check_branch
        %227 = sbr.rel (%p224) target = $region36
      $region35: #{tpu_custom_call.1} parent=5 // pred_region
        %s228 = ssub.s32 %s18, 1
        %s229 = sand.u32 %s43, 1
        %s230 = scalar_lea.sflag [#allocation3], %s229
        %s231 = sand.u32 %s43, 1
        %s232 = smul.addr %s231, 128
        %s233 = scalar_lea.vmem [#allocation2], %s232
        // Predicated region
        $region37: #{tpu_custom_call.1} parent=35 // pred_check
          %p234 = pneg %p56
        $region38: #{tpu_custom_call.1} parent=35 // pred_check_branch
          %236 = sbr.rel (%p234) target = $region40
        $region39: #{tpu_custom_call.1} parent=35 // pred_region
          %237 = dma.done %s230, 2048
        $region40: #{tpu_custom_call.1} parent=35 // pred_fallthru
          _
        // Predicated region
        $region41: #{tpu_custom_call.1} parent=35 // pred_check
          %p238 = pneg %p77
        $region42: #{tpu_custom_call.1} parent=35 // pred_check_branch
          %240 = sbr.rel (%p238) target = $region44
        $region43: #{tpu_custom_call.1} parent=35 // pred_region
          %241 = dma.done [#allocation6], 256
        $region44: #{tpu_custom_call.1} parent=35 // pred_fallthru
          _
        // Predicated region
        $region45: #{tpu_custom_call.1} parent=35 // pred_check
          %p242 = pneg %p98
        $region46: #{tpu_custom_call.1} parent=35 // pred_check_branch
          %244 = sbr.rel (%p242) target = $region48
        $region47: #{tpu_custom_call.1} parent=35 // pred_region
          %245 = dma.done [#allocation6], 16
        $region48: #{tpu_custom_call.1} parent=35 // pred_fallthru
          _
        // Predicated region
        $region49: #{tpu_custom_call.1} parent=35 // pred_check
          %p246 = pneg %p119
        $region50: #{tpu_custom_call.1} parent=35 // pred_check_branch
          %248 = sbr.rel (%p246) target = $region52
        $region51: #{tpu_custom_call.1} parent=35 // pred_region
          %249 = dma.done [#allocation9], 16
        $region52: #{tpu_custom_call.1} parent=35 // pred_fallthru
          _
        %s250 = sand.u32 %s43, 1
        %s251 = scalar_lea.sflag [#allocation3], %s250
        %s252 = sand.u32 %s43, 1
        %s253 = smul.addr %s252, 128
        %s254 = scalar_lea.vmem [#allocation2], %s253
        %p255 = pneg %p56
        %p256 = pneg %p53
        %p257 = pneg %p77
        %p258 = pneg %p74
        %p259 = pneg %p98
        %p260 = pneg %p95
        %p261 = pneg %p119
        %p262 = pneg %p116
        %p263 = pneg %p147
        %p264 = pneg %p144
        %s265 = sand.u32 %s134, 1
        %s266 = scalar_lea.sflag [#allocation4], %s265
        %s267 = sand.u32 %s134, 1
        %s268 = smul.addr %s267, 16
        %s269 = scalar_lea.vmem [#allocation10], %s268
        %s271 = smul.u32 %s28, 16
        %s272 = smul.u32 %s271, 2
        %s273 = smul.addr %s272, 4
        %s274 = scalar_lea.vmem %s233, %s273 [#allocation2]
        %v275 = vld [vmem:[%s274] sm:$0xf]
        %v276 = vld [vmem:[%s274 + $0x4] sm:$0xf]
        %v277 = vld [vmem:[%s274 + $0x8] sm:$0xf]
        %v278 = vld [vmem:[%s274 + $0xc] sm:$0xf]
        %v279 = vld [vmem:[%s274 + $0x10] sm:$0xf]
        %v280 = vld [vmem:[%s274 + $0x14] sm:$0xf]
        %v281 = vld [vmem:[%s274 + $0x18] sm:$0xf]
        %v282 = vld [vmem:[%s274 + $0x1c] sm:$0xf]
        %v283 = vld [vmem:[%s274 + $0x20] sm:$0xf]
        %v284 = vld [vmem:[%s274 + $0x24] sm:$0xf]
        %v285 = vld [vmem:[%s274 + $0x28] sm:$0xf]
        %v286 = vld [vmem:[%s274 + $0x2c] sm:$0xf]
        %v287 = vld [vmem:[%s274 + $0x30] sm:$0xf]
        %v288 = vld [vmem:[%s274 + $0x34] sm:$0xf]
        %v289 = vld [vmem:[%s274 + $0x38] sm:$0xf]
        %v290 = vld [vmem:[%s274 + $0x3c] sm:$0xf]
        %v291 = vld [vmem:[%s274 + $0x40] sm:$0xf]
        %v292 = vld [vmem:[%s274 + $0x44] sm:$0xf]
        %v293 = vld [vmem:[%s274 + $0x48] sm:$0xf]
        %v294 = vld [vmem:[%s274 + $0x4c] sm:$0xf]
        %v295 = vld [vmem:[%s274 + $0x50] sm:$0xf]
        %v296 = vld [vmem:[%s274 + $0x54] sm:$0xf]
        %v297 = vld [vmem:[%s274 + $0x58] sm:$0xf]
        %v298 = vld [vmem:[%s274 + $0x5c] sm:$0xf]
        %v299 = vld [vmem:[%s274 + $0x60] sm:$0xf]
        %v300 = vld [vmem:[%s274 + $0x64] sm:$0xf]
        %v301 = vld [vmem:[%s274 + $0x68] sm:$0xf]
        %v302 = vld [vmem:[%s274 + $0x6c] sm:$0xf]
        %v303 = vld [vmem:[%s274 + $0x70] sm:$0xf]
        %v304 = vld [vmem:[%s274 + $0x74] sm:$0xf]
        %v305 = vld [vmem:[%s274 + $0x78] sm:$0xf]
        %v306 = vld [vmem:[%s274 + $0x7c] sm:$0xf]
        %s307 = ssub.s32 %s271, 1
        %p308 = scmp.gt.s32.totalorder %s307, 0
        %s309 = scalar_select %p308, %s307, 0
        %s310 = smul.u32 %s309, 2
        %s311 = smul.addr %s310, 4
        %s312 = scalar_lea.vmem %s233, %s311 [#allocation2]
        %v313 = vld [vmem:[%s312] sm:$0xf]
        %v314 = vld [vmem:[%s312 + $0x4] sm:$0xf]
        %s315 = sadd.s32 %s271, 16
        %p316 = scmp.lt.s32.totalorder %s315, 15
        %s317 = scalar_select %p316, %s315, 15
        %s318 = smul.u32 %s317, 2
        %s319 = smul.addr %s318, 4
        %s320 = scalar_lea.vmem %s233, %s319 [#allocation2]
        %v321 = vld [vmem:[%s320] sm:$0xf]
        %v322 = vld [vmem:[%s320 + $0x4] sm:$0xf]
        %p323 = scmp.gt.s32.totalorder %s28, 0
        %s324 = scalar_select %p323, 1, 0
        %v325 = vstv %s324
        %vm326 = vcmp.eq.s32.totalorder %v325, 1
        %v327 = vsel %vm326, %v313, 0
        %v328 = vsel %vm326, %v314, 0
        %p329 = scmp.lt.s32.totalorder %s28, 0
        %s330 = scalar_select %p329, 1, 0
        %v331 = vstv %s330
        %vm332 = vcmp.eq.s32.totalorder %v331, 1
        %v333 = vsel %vm332, %v321, 0
        %v334 = vsel %vm332, %v322, 0
        %v371 = vunpack.c.l.b16 %v327
        %v372 = vunpack.c.l.b16 %v328
        %v373 = vunpack.c.l.b16 %v275
        %v374 = vunpack.c.l.b16 %v276
        %v375 = vunpack.c.l.b16 %v277
        %v376 = vunpack.c.l.b16 %v278
        %v377 = vunpack.c.l.b16 %v279
        %v378 = vunpack.c.l.b16 %v280
        %v379 = vunpack.c.l.b16 %v281
        %v380 = vunpack.c.l.b16 %v282
        %v381 = vunpack.c.l.b16 %v283
        %v382 = vunpack.c.l.b16 %v284
        %v383 = vunpack.c.l.b16 %v285
        %v384 = vunpack.c.l.b16 %v286
        %v385 = vunpack.c.l.b16 %v287
        %v386 = vunpack.c.l.b16 %v288
        %v387 = vunpack.c.l.b16 %v289
        %v388 = vunpack.c.l.b16 %v290
        %v389 = vunpack.c.l.b16 %v291
        %v390 = vunpack.c.l.b16 %v292
        %v391 = vunpack.c.l.b16 %v293
        %v392 = vunpack.c.l.b16 %v294
        %v393 = vunpack.c.l.b16 %v295
        %v394 = vunpack.c.l.b16 %v296
        %v395 = vunpack.c.l.b16 %v297
        %v396 = vunpack.c.l.b16 %v298
        %v397 = vunpack.c.l.b16 %v299
        %v398 = vunpack.c.l.b16 %v300
        %v399 = vunpack.c.l.b16 %v301
        %v400 = vunpack.c.l.b16 %v302
        %v401 = vunpack.c.l.b16 %v303
        %v402 = vunpack.c.l.b16 %v304
        %v403 = vunpack.c.l.b16 %v305
        %v404 = vunpack.c.l.b16 %v306
        %v405 = vunpack.c.l.b16 %v333
        %v406 = vunpack.c.l.b16 %v334
        %v407 = vpack.c.b16 %v372, %v371
        %v408 = vpack.c.b16 %v374, %v373
        %v409 = vpack.c.b16 %v376, %v375
        %v410 = vpack.c.b16 %v378, %v377
        %v411 = vpack.c.b16 %v380, %v379
        %v412 = vpack.c.b16 %v382, %v381
        %v413 = vpack.c.b16 %v384, %v383
        %v414 = vpack.c.b16 %v386, %v385
        %v415 = vpack.c.b16 %v388, %v387
        %v416 = vpack.c.b16 %v390, %v389
        %v417 = vpack.c.b16 %v392, %v391
        %v418 = vpack.c.b16 %v394, %v393
        %v419 = vpack.c.b16 %v396, %v395
        %v420 = vpack.c.b16 %v398, %v397
        %v421 = vpack.c.b16 %v400, %v399
        %v422 = vpack.c.b16 %v402, %v401
        %v423 = vpack.c.b16 %v404, %v403
        %v424 = vpack.c.b16 %v406, %v405
        %v426 = vshrl.u32 %v407, 16
        %v428 = vrot.slane %v426, 7
        %v429 = vshll.u32 %v407, 16
        %v431 = vor.u32 %v428, %v429
        %v433 = vshrl.u32 %v408, 16
        %v435 = vrot.slane %v433, 7
        %v436 = vshll.u32 %v408, 16
        %v438 = vor.u32 %v435, %v436
        %v440 = vshrl.u32 %v409, 16
        %v442 = vrot.slane %v440, 7
        %v443 = vshll.u32 %v409, 16
        %v445 = vor.u32 %v442, %v443
        %v447 = vshrl.u32 %v410, 16
        %v449 = vrot.slane %v447, 7
        %v450 = vshll.u32 %v410, 16
        %v452 = vor.u32 %v449, %v450
        %v454 = vshrl.u32 %v411, 16
        %v456 = vrot.slane %v454, 7
        %v457 = vshll.u32 %v411, 16
        %v459 = vor.u32 %v456, %v457
        %v461 = vshrl.u32 %v412, 16
        %v463 = vrot.slane %v461, 7
        %v464 = vshll.u32 %v412, 16
        %v466 = vor.u32 %v463, %v464
        %v468 = vshrl.u32 %v413, 16
        %v470 = vrot.slane %v468, 7
        %v471 = vshll.u32 %v413, 16
        %v473 = vor.u32 %v470, %v471
        %v475 = vshrl.u32 %v414, 16
        %v477 = vrot.slane %v475, 7
        %v478 = vshll.u32 %v414, 16
        %v480 = vor.u32 %v477, %v478
        %v482 = vshrl.u32 %v415, 16
        %v484 = vrot.slane %v482, 7
        %v485 = vshll.u32 %v415, 16
        %v487 = vor.u32 %v484, %v485
        %v489 = vshrl.u32 %v416, 16
        %v491 = vrot.slane %v489, 7
        %v492 = vshll.u32 %v416, 16
        %v494 = vor.u32 %v491, %v492
        %v496 = vshrl.u32 %v417, 16
        %v498 = vrot.slane %v496, 7
        %v499 = vshll.u32 %v417, 16
        %v501 = vor.u32 %v498, %v499
        %v503 = vshrl.u32 %v418, 16
        %v505 = vrot.slane %v503, 7
        %v506 = vshll.u32 %v418, 16
        %v508 = vor.u32 %v505, %v506
        %v510 = vshrl.u32 %v419, 16
        %v512 = vrot.slane %v510, 7
        %v513 = vshll.u32 %v419, 16
        %v515 = vor.u32 %v512, %v513
        %v517 = vshrl.u32 %v420, 16
        %v519 = vrot.slane %v517, 7
        %v520 = vshll.u32 %v420, 16
        %v522 = vor.u32 %v519, %v520
        %v524 = vshrl.u32 %v421, 16
        %v526 = vrot.slane %v524, 7
        %v527 = vshll.u32 %v421, 16
        %v529 = vor.u32 %v526, %v527
        %v531 = vshrl.u32 %v422, 16
        %v533 = vrot.slane %v531, 7
        %v534 = vshll.u32 %v422, 16
        %v536 = vor.u32 %v533, %v534
        %v538 = vshrl.u32 %v423, 16
        %v540 = vrot.slane %v538, 7
        %v541 = vshll.u32 %v423, 16
        %v543 = vor.u32 %v540, %v541
        %v545 = vshrl.u32 %v424, 16
        %v547 = vrot.slane %v545, 7
        %v548 = vshll.u32 %v424, 16
        %v550 = vor.u32 %v547, %v548
        %vm569 = vcmask 1040384
        %vm570 = vsmask.f32 256
        %vm571 = vmand %vm569, %vm570
        %v572 = vsel %vm571, 0, %v431
        %v573 = vsel %vm571, 0, %v438
        %v574 = vsel %vm571, 0, %v445
        %v575 = vsel %vm571, 0, %v452
        %v576 = vsel %vm571, 0, %v459
        %v577 = vsel %vm571, 0, %v466
        %v578 = vsel %vm571, 0, %v473
        %v579 = vsel %vm571, 0, %v480
        %v580 = vsel %vm571, 0, %v487
        %v581 = vsel %vm571, 0, %v494
        %v582 = vsel %vm571, 0, %v501
        %v583 = vsel %vm571, 0, %v508
        %v584 = vsel %vm571, 0, %v515
        %v585 = vsel %vm571, 0, %v522
        %v586 = vsel %vm571, 0, %v529
        %v587 = vsel %vm571, 0, %v536
        %v588 = vsel %vm571, 0, %v543
        %v589 = vsel %vm571, 0, %v550
        %v590 = vrot.slane %v429, 1
        %v591 = vor.u32 %v426, %v590
        %v592 = vrot.slane %v436, 1
        %v593 = vor.u32 %v433, %v592
        %v594 = vrot.slane %v443, 1
        %v595 = vor.u32 %v440, %v594
        %v596 = vrot.slane %v450, 1
        %v597 = vor.u32 %v447, %v596
        %v598 = vrot.slane %v457, 1
        %v599 = vor.u32 %v454, %v598
        %v600 = vrot.slane %v464, 1
        %v601 = vor.u32 %v461, %v600
        %v602 = vrot.slane %v471, 1
        %v603 = vor.u32 %v468, %v602
        %v604 = vrot.slane %v478, 1
        %v605 = vor.u32 %v475, %v604
        %v606 = vrot.slane %v485, 1
        %v607 = vor.u32 %v482, %v606
        %v608 = vrot.slane %v492, 1
        %v609 = vor.u32 %v489, %v608
        %v610 = vrot.slane %v499, 1
        %v611 = vor.u32 %v496, %v610
        %v612 = vrot.slane %v506, 1
        %v613 = vor.u32 %v503, %v612
        %v614 = vrot.slane %v513, 1
        %v615 = vor.u32 %v510, %v614
        %v616 = vrot.slane %v520, 1
        %v617 = vor.u32 %v517, %v616
        %v618 = vrot.slane %v527, 1
        %v619 = vor.u32 %v524, %v618
        %v620 = vrot.slane %v534, 1
        %v621 = vor.u32 %v531, %v620
        %v622 = vrot.slane %v541, 1
        %v623 = vor.u32 %v538, %v622
        %v624 = vrot.slane %v548, 1
        %v625 = vor.u32 %v545, %v624
        %vm644 = vcmask 1047552
        %vm645 = vsmask.f32 7424
        %vm646 = vmand %vm644, %vm645
        %v647 = vsel %vm646, %v591, 0
        %v648 = vsel %vm646, %v593, 0
        %v649 = vsel %vm646, %v595, 0
        %v650 = vsel %vm646, %v597, 0
        %v651 = vsel %vm646, %v599, 0
        %v652 = vsel %vm646, %v601, 0
        %v653 = vsel %vm646, %v603, 0
        %v654 = vsel %vm646, %v605, 0
        %v655 = vsel %vm646, %v607, 0
        %v656 = vsel %vm646, %v609, 0
        %v657 = vsel %vm646, %v611, 0
        %v658 = vsel %vm646, %v613, 0
        %v659 = vsel %vm646, %v615, 0
        %v660 = vsel %vm646, %v617, 0
        %v661 = vsel %vm646, %v619, 0
        %v662 = vsel %vm646, %v621, 0
        %v663 = vsel %vm646, %v623, 0
        %v664 = vsel %vm646, %v625, 0
        %665 = vrot.lane.b32.xlu0 %v407, 3
        %v666 = vpop.permute.xlu0 %665
        %667 = vrot.lane.b32.xlu0 %v408, 3
        %v668 = vpop.permute.xlu0 %667
        %669 = vrot.lane.b32.xlu0 %v409, 3
        %v670 = vpop.permute.xlu0 %669
        %671 = vrot.lane.b32.xlu0 %v410, 3
        %v672 = vpop.permute.xlu0 %671
        %673 = vrot.lane.b32.xlu0 %v411, 3
        %v674 = vpop.permute.xlu0 %673
        %675 = vrot.lane.b32.xlu0 %v412, 3
        %v676 = vpop.permute.xlu0 %675
        %677 = vrot.lane.b32.xlu0 %v413, 3
        %v678 = vpop.permute.xlu0 %677
        %679 = vrot.lane.b32.xlu0 %v414, 3
        %v680 = vpop.permute.xlu0 %679
        %681 = vrot.lane.b32.xlu0 %v415, 3
        %v682 = vpop.permute.xlu0 %681
        %683 = vrot.lane.b32.xlu0 %v416, 3
        %v684 = vpop.permute.xlu0 %683
        %685 = vrot.lane.b32.xlu0 %v417, 3
        %v686 = vpop.permute.xlu0 %685
        %687 = vrot.lane.b32.xlu0 %v418, 3
        %v688 = vpop.permute.xlu0 %687
        %689 = vrot.lane.b32.xlu0 %v419, 3
        %v690 = vpop.permute.xlu0 %689
        %691 = vrot.lane.b32.xlu0 %v420, 3
        %v692 = vpop.permute.xlu0 %691
        %693 = vrot.lane.b32.xlu0 %v421, 3
        %v694 = vpop.permute.xlu0 %693
        %695 = vrot.lane.b32.xlu0 %v422, 3
        %v696 = vpop.permute.xlu0 %695
        %713 = vrot.lane.b32.xlu0 %v647, 6
        %v714 = vpop.permute.xlu0 %713
        %715 = vrot.lane.b32.xlu0 %v648, 6
        %v716 = vpop.permute.xlu0 %715
        %717 = vrot.lane.b32.xlu0 %v649, 6
        %v718 = vpop.permute.xlu0 %717
        %719 = vrot.lane.b32.xlu0 %v650, 6
        %v720 = vpop.permute.xlu0 %719
        %721 = vrot.lane.b32.xlu0 %v651, 6
        %v722 = vpop.permute.xlu0 %721
        %723 = vrot.lane.b32.xlu0 %v652, 6
        %v724 = vpop.permute.xlu0 %723
        %725 = vrot.lane.b32.xlu0 %v653, 6
        %v726 = vpop.permute.xlu0 %725
        %727 = vrot.lane.b32.xlu0 %v654, 6
        %v728 = vpop.permute.xlu0 %727
        %729 = vrot.lane.b32.xlu0 %v655, 6
        %v730 = vpop.permute.xlu0 %729
        %731 = vrot.lane.b32.xlu0 %v656, 6
        %v732 = vpop.permute.xlu0 %731
        %733 = vrot.lane.b32.xlu0 %v657, 6
        %v734 = vpop.permute.xlu0 %733
        %735 = vrot.lane.b32.xlu0 %v658, 6
        %v736 = vpop.permute.xlu0 %735
        %737 = vrot.lane.b32.xlu0 %v659, 6
        %v738 = vpop.permute.xlu0 %737
        %739 = vrot.lane.b32.xlu0 %v660, 6
        %v740 = vpop.permute.xlu0 %739
        %741 = vrot.lane.b32.xlu0 %v661, 6
        %v742 = vpop.permute.xlu0 %741
        %743 = vrot.lane.b32.xlu0 %v662, 6
        %v744 = vpop.permute.xlu0 %743
        %761 = vrot.lane.b32.xlu0 %v573, 9
        %v762 = vpop.permute.xlu0 %761
        %763 = vrot.lane.b32.xlu0 %v574, 9
        %v764 = vpop.permute.xlu0 %763
        %765 = vrot.lane.b32.xlu0 %v575, 9
        %v766 = vpop.permute.xlu0 %765
        %767 = vrot.lane.b32.xlu0 %v576, 9
        %v768 = vpop.permute.xlu0 %767
        %769 = vrot.lane.b32.xlu0 %v577, 9
        %v770 = vpop.permute.xlu0 %769
        %771 = vrot.lane.b32.xlu0 %v578, 9
        %v772 = vpop.permute.xlu0 %771
        %773 = vrot.lane.b32.xlu0 %v579, 9
        %v774 = vpop.permute.xlu0 %773
        %775 = vrot.lane.b32.xlu0 %v580, 9
        %v776 = vpop.permute.xlu0 %775
        %777 = vrot.lane.b32.xlu0 %v581, 9
        %v778 = vpop.permute.xlu0 %777
        %779 = vrot.lane.b32.xlu0 %v582, 9
        %v780 = vpop.permute.xlu0 %779
        %781 = vrot.lane.b32.xlu0 %v583, 9
        %v782 = vpop.permute.xlu0 %781
        %783 = vrot.lane.b32.xlu0 %v584, 9
        %v784 = vpop.permute.xlu0 %783
        %785 = vrot.lane.b32.xlu0 %v585, 9
        %v786 = vpop.permute.xlu0 %785
        %787 = vrot.lane.b32.xlu0 %v586, 9
        %v788 = vpop.permute.xlu0 %787
        %789 = vrot.lane.b32.xlu0 %v587, 9
        %v790 = vpop.permute.xlu0 %789
        %791 = vrot.lane.b32.xlu0 %v588, 9
        %v792 = vpop.permute.xlu0 %791
        %793 = vrot.lane.b32.xlu0 %v408, 12
        %v794 = vpop.permute.xlu0 %793
        %795 = vrot.lane.b32.xlu0 %v409, 12
        %v796 = vpop.permute.xlu0 %795
        %797 = vrot.lane.b32.xlu0 %v410, 12
        %v798 = vpop.permute.xlu0 %797
        %799 = vrot.lane.b32.xlu0 %v411, 12
        %v800 = vpop.permute.xlu0 %799
        %801 = vrot.lane.b32.xlu0 %v412, 12
        %v802 = vpop.permute.xlu0 %801
        %803 = vrot.lane.b32.xlu0 %v413, 12
        %v804 = vpop.permute.xlu0 %803
        %805 = vrot.lane.b32.xlu0 %v414, 12
        %v806 = vpop.permute.xlu0 %805
        %807 = vrot.lane.b32.xlu0 %v415, 12
        %v808 = vpop.permute.xlu0 %807
        %809 = vrot.lane.b32.xlu0 %v416, 12
        %v810 = vpop.permute.xlu0 %809
        %811 = vrot.lane.b32.xlu0 %v417, 12
        %v812 = vpop.permute.xlu0 %811
        %813 = vrot.lane.b32.xlu0 %v418, 12
        %v814 = vpop.permute.xlu0 %813
        %815 = vrot.lane.b32.xlu0 %v419, 12
        %v816 = vpop.permute.xlu0 %815
        %817 = vrot.lane.b32.xlu0 %v420, 12
        %v818 = vpop.permute.xlu0 %817
        %819 = vrot.lane.b32.xlu0 %v421, 12
        %v820 = vpop.permute.xlu0 %819
        %821 = vrot.lane.b32.xlu0 %v422, 12
        %v822 = vpop.permute.xlu0 %821
        %823 = vrot.lane.b32.xlu0 %v423, 12
        %v824 = vpop.permute.xlu0 %823
        %826 = vrot.lane.b32.xlu0 %v648, 15
        %v827 = vpop.permute.xlu0 %826
        %828 = vrot.lane.b32.xlu0 %v649, 15
        %v829 = vpop.permute.xlu0 %828
        %830 = vrot.lane.b32.xlu0 %v650, 15
        %v831 = vpop.permute.xlu0 %830
        %832 = vrot.lane.b32.xlu0 %v651, 15
        %v833 = vpop.permute.xlu0 %832
        %834 = vrot.lane.b32.xlu0 %v652, 15
        %v835 = vpop.permute.xlu0 %834
        %836 = vrot.lane.b32.xlu0 %v653, 15
        %v837 = vpop.permute.xlu0 %836
        %838 = vrot.lane.b32.xlu0 %v654, 15
        %v839 = vpop.permute.xlu0 %838
        %840 = vrot.lane.b32.xlu0 %v655, 15
        %v841 = vpop.permute.xlu0 %840
        %842 = vrot.lane.b32.xlu0 %v656, 15
        %v843 = vpop.permute.xlu0 %842
        %844 = vrot.lane.b32.xlu0 %v657, 15
        %v845 = vpop.permute.xlu0 %844
        %846 = vrot.lane.b32.xlu0 %v658, 15
        %v847 = vpop.permute.xlu0 %846
        %848 = vrot.lane.b32.xlu0 %v659, 15
        %v849 = vpop.permute.xlu0 %848
        %850 = vrot.lane.b32.xlu0 %v660, 15
        %v851 = vpop.permute.xlu0 %850
        %852 = vrot.lane.b32.xlu0 %v661, 15
        %v853 = vpop.permute.xlu0 %852
        %854 = vrot.lane.b32.xlu0 %v662, 15
        %v855 = vpop.permute.xlu0 %854
        %856 = vrot.lane.b32.xlu0 %v663, 15
        %v857 = vpop.permute.xlu0 %856
        %859 = vrot.lane.b32.xlu0 %v574, 18
        %v860 = vpop.permute.xlu0 %859
        %861 = vrot.lane.b32.xlu0 %v575, 18
        %v862 = vpop.permute.xlu0 %861
        %863 = vrot.lane.b32.xlu0 %v576, 18
        %v864 = vpop.permute.xlu0 %863
        %865 = vrot.lane.b32.xlu0 %v577, 18
        %v866 = vpop.permute.xlu0 %865
        %867 = vrot.lane.b32.xlu0 %v578, 18
        %v868 = vpop.permute.xlu0 %867
        %869 = vrot.lane.b32.xlu0 %v579, 18
        %v870 = vpop.permute.xlu0 %869
        %871 = vrot.lane.b32.xlu0 %v580, 18
        %v872 = vpop.permute.xlu0 %871
        %873 = vrot.lane.b32.xlu0 %v581, 18
        %v874 = vpop.permute.xlu0 %873
        %875 = vrot.lane.b32.xlu0 %v582, 18
        %v876 = vpop.permute.xlu0 %875
        %877 = vrot.lane.b32.xlu0 %v583, 18
        %v878 = vpop.permute.xlu0 %877
        %879 = vrot.lane.b32.xlu0 %v584, 18
        %v880 = vpop.permute.xlu0 %879
        %881 = vrot.lane.b32.xlu0 %v585, 18
        %v882 = vpop.permute.xlu0 %881
        %883 = vrot.lane.b32.xlu0 %v586, 18
        %v884 = vpop.permute.xlu0 %883
        %885 = vrot.lane.b32.xlu0 %v587, 18
        %v886 = vpop.permute.xlu0 %885
        %887 = vrot.lane.b32.xlu0 %v588, 18
        %v888 = vpop.permute.xlu0 %887
        %889 = vrot.lane.b32.xlu0 %v589, 18
        %v890 = vpop.permute.xlu0 %889
        %891 = vrot.lane.b32.xlu0 %v409, 21
        %v892 = vpop.permute.xlu0 %891
        %893 = vrot.lane.b32.xlu0 %v410, 21
        %v894 = vpop.permute.xlu0 %893
        %895 = vrot.lane.b32.xlu0 %v411, 21
        %v896 = vpop.permute.xlu0 %895
        %897 = vrot.lane.b32.xlu0 %v412, 21
        %v898 = vpop.permute.xlu0 %897
        %899 = vrot.lane.b32.xlu0 %v413, 21
        %v900 = vpop.permute.xlu0 %899
        %901 = vrot.lane.b32.xlu0 %v414, 21
        %v902 = vpop.permute.xlu0 %901
        %903 = vrot.lane.b32.xlu0 %v415, 21
        %v904 = vpop.permute.xlu0 %903
        %905 = vrot.lane.b32.xlu0 %v416, 21
        %v906 = vpop.permute.xlu0 %905
        %907 = vrot.lane.b32.xlu0 %v417, 21
        %v908 = vpop.permute.xlu0 %907
        %909 = vrot.lane.b32.xlu0 %v418, 21
        %v910 = vpop.permute.xlu0 %909
        %911 = vrot.lane.b32.xlu0 %v419, 21
        %v912 = vpop.permute.xlu0 %911
        %913 = vrot.lane.b32.xlu0 %v420, 21
        %v914 = vpop.permute.xlu0 %913
        %915 = vrot.lane.b32.xlu0 %v421, 21
        %v916 = vpop.permute.xlu0 %915
        %917 = vrot.lane.b32.xlu0 %v422, 21
        %v918 = vpop.permute.xlu0 %917
        %919 = vrot.lane.b32.xlu0 %v423, 21
        %v920 = vpop.permute.xlu0 %919
        %921 = vrot.lane.b32.xlu0 %v424, 21
        %v922 = vpop.permute.xlu0 %921
        %924 = vrot.lane.b32.xlu0 %v649, 24
        %v925 = vpop.permute.xlu0 %924
        %926 = vrot.lane.b32.xlu0 %v650, 24
        %v927 = vpop.permute.xlu0 %926
        %928 = vrot.lane.b32.xlu0 %v651, 24
        %v929 = vpop.permute.xlu0 %928
        %930 = vrot.lane.b32.xlu0 %v652, 24
        %v931 = vpop.permute.xlu0 %930
        %932 = vrot.lane.b32.xlu0 %v653, 24
        %v933 = vpop.permute.xlu0 %932
        %934 = vrot.lane.b32.xlu0 %v654, 24
        %v935 = vpop.permute.xlu0 %934
        %936 = vrot.lane.b32.xlu0 %v655, 24
        %v937 = vpop.permute.xlu0 %936
        %938 = vrot.lane.b32.xlu0 %v656, 24
        %v939 = vpop.permute.xlu0 %938
        %940 = vrot.lane.b32.xlu0 %v657, 24
        %v941 = vpop.permute.xlu0 %940
        %942 = vrot.lane.b32.xlu0 %v658, 24
        %v943 = vpop.permute.xlu0 %942
        %944 = vrot.lane.b32.xlu0 %v659, 24
        %v945 = vpop.permute.xlu0 %944
        %946 = vrot.lane.b32.xlu0 %v660, 24
        %v947 = vpop.permute.xlu0 %946
        %948 = vrot.lane.b32.xlu0 %v661, 24
        %v949 = vpop.permute.xlu0 %948
        %950 = vrot.lane.b32.xlu0 %v662, 24
        %v951 = vpop.permute.xlu0 %950
        %952 = vrot.lane.b32.xlu0 %v663, 24
        %v953 = vpop.permute.xlu0 %952
        %954 = vrot.lane.b32.xlu0 %v664, 24
        %v955 = vpop.permute.xlu0 %954
        %vm956 = vcmask 23552
        %v959 = vsel %vm956, %v572, %v666
        %v962 = vsel %vm956, %v573, %v668
        %v965 = vsel %vm956, %v574, %v670
        %v968 = vsel %vm956, %v575, %v672
        %v971 = vsel %vm956, %v576, %v674
        %v974 = vsel %vm956, %v577, %v676
        %v977 = vsel %vm956, %v578, %v678
        %v980 = vsel %vm956, %v579, %v680
        %v983 = vsel %vm956, %v580, %v682
        %v986 = vsel %vm956, %v581, %v684
        %v989 = vsel %vm956, %v582, %v686
        %v992 = vsel %vm956, %v583, %v688
        %v995 = vsel %vm956, %v584, %v690
        %v998 = vsel %vm956, %v585, %v692
        %v1001 = vsel %vm956, %v586, %v694
        %v1004 = vsel %vm956, %v587, %v696
        %vm1005 = vcmask 48128
        %v1007 = vsel %vm1005, %v959, %v714
        %v1009 = vsel %vm1005, %v962, %v716
        %v1011 = vsel %vm1005, %v965, %v718
        %v1013 = vsel %vm1005, %v968, %v720
        %v1015 = vsel %vm1005, %v971, %v722
        %v1017 = vsel %vm1005, %v974, %v724
        %v1019 = vsel %vm1005, %v977, %v726
        %v1021 = vsel %vm1005, %v980, %v728
        %v1023 = vsel %vm1005, %v983, %v730
        %v1025 = vsel %vm1005, %v986, %v732
        %v1027 = vsel %vm1005, %v989, %v734
        %v1029 = vsel %vm1005, %v992, %v736
        %v1031 = vsel %vm1005, %v995, %v738
        %v1033 = vsel %vm1005, %v998, %v740
        %v1035 = vsel %vm1005, %v1001, %v742
        %v1037 = vsel %vm1005, %v1004, %v744
        %vm1038 = vcmask 72704
        %v1040 = vsel %vm1038, %v1007, %v762
        %v1042 = vsel %vm1038, %v1009, %v764
        %v1044 = vsel %vm1038, %v1011, %v766
        %v1046 = vsel %vm1038, %v1013, %v768
        %v1048 = vsel %vm1038, %v1015, %v770
        %v1050 = vsel %vm1038, %v1017, %v772
        %v1052 = vsel %vm1038, %v1019, %v774
        %v1054 = vsel %vm1038, %v1021, %v776
        %v1056 = vsel %vm1038, %v1023, %v778
        %v1058 = vsel %vm1038, %v1025, %v780
        %v1060 = vsel %vm1038, %v1027, %v782
        %v1062 = vsel %vm1038, %v1029, %v784
        %v1064 = vsel %vm1038, %v1031, %v786
        %v1066 = vsel %vm1038, %v1033, %v788
        %v1068 = vsel %vm1038, %v1035, %v790
        %v1070 = vsel %vm1038, %v1037, %v792
        %vm1071 = vcmask 97280
        %v1073 = vsel %vm1071, %v1040, %v794
        %v1075 = vsel %vm1071, %v1042, %v796
        %v1077 = vsel %vm1071, %v1044, %v798
        %v1079 = vsel %vm1071, %v1046, %v800
        %v1081 = vsel %vm1071, %v1048, %v802
        %v1083 = vsel %vm1071, %v1050, %v804
        %v1085 = vsel %vm1071, %v1052, %v806
        %v1087 = vsel %vm1071, %v1054, %v808
        %v1089 = vsel %vm1071, %v1056, %v810
        %v1091 = vsel %vm1071, %v1058, %v812
        %v1093 = vsel %vm1071, %v1060, %v814
        %v1095 = vsel %vm1071, %v1062, %v816
        %v1097 = vsel %vm1071, %v1064, %v818
        %v1099 = vsel %vm1071, %v1066, %v820
        %v1101 = vsel %vm1071, %v1068, %v822
        %v1103 = vsel %vm1071, %v1070, %v824
        %vm1104 = vcmask 121856
        %v1106 = vsel %vm1104, %v1073, %v827
        %v1108 = vsel %vm1104, %v1075, %v829
        %v1110 = vsel %vm1104, %v1077, %v831
        %v1112 = vsel %vm1104, %v1079, %v833
        %v1114 = vsel %vm1104, %v1081, %v835
        %v1116 = vsel %vm1104, %v1083, %v837
        %v1118 = vsel %vm1104, %v1085, %v839
        %v1120 = vsel %vm1104, %v1087, %v841
        %v1122 = vsel %vm1104, %v1089, %v843
        %v1124 = vsel %vm1104, %v1091, %v845
        %v1126 = vsel %vm1104, %v1093, %v847
        %v1128 = vsel %vm1104, %v1095, %v849
        %v1130 = vsel %vm1104, %v1097, %v851
        %v1132 = vsel %vm1104, %v1099, %v853
        %v1134 = vsel %vm1104, %v1101, %v855
        %v1136 = vsel %vm1104, %v1103, %v857
        %vm1137 = vcmask 146432
        %v1139 = vsel %vm1137, %v1106, %v860
        %v1141 = vsel %vm1137, %v1108, %v862
        %v1143 = vsel %vm1137, %v1110, %v864
        %v1145 = vsel %vm1137, %v1112, %v866
        %v1147 = vsel %vm1137, %v1114, %v868
        %v1149 = vsel %vm1137, %v1116, %v870
        %v1151 = vsel %vm1137, %v1118, %v872
        %v1153 = vsel %vm1137, %v1120, %v874
        %v1155 = vsel %vm1137, %v1122, %v876
        %v1157 = vsel %vm1137, %v1124, %v878
        %v1159 = vsel %vm1137, %v1126, %v880
        %v1161 = vsel %vm1137, %v1128, %v882
        %v1163 = vsel %vm1137, %v1130, %v884
        %v1165 = vsel %vm1137, %v1132, %v886
        %v1167 = vsel %vm1137, %v1134, %v888
        %v1169 = vsel %vm1137, %v1136, %v890
        %vm1170 = vcmask 171008
        %v1172 = vsel %vm1170, %v1139, %v892
        %v1174 = vsel %vm1170, %v1141, %v894
        %v1176 = vsel %vm1170, %v1143, %v896
        %v1178 = vsel %vm1170, %v1145, %v898
        %v1180 = vsel %vm1170, %v1147, %v900
        %v1182 = vsel %vm1170, %v1149, %v902
        %v1184 = vsel %vm1170, %v1151, %v904
        %v1186 = vsel %vm1170, %v1153, %v906
        %v1188 = vsel %vm1170, %v1155, %v908
        %v1190 = vsel %vm1170, %v1157, %v910
        %v1192 = vsel %vm1170, %v1159, %v912
        %v1194 = vsel %vm1170, %v1161, %v914
        %v1196 = vsel %vm1170, %v1163, %v916
        %v1198 = vsel %vm1170, %v1165, %v918
        %v1200 = vsel %vm1170, %v1167, %v920
        %v1202 = vsel %vm1170, %v1169, %v922
        %vm1203 = vcmask 195584
        %v1205 = vsel %vm1203, %v1172, %v925
        %v1207 = vsel %vm1203, %v1174, %v927
        %v1209 = vsel %vm1203, %v1176, %v929
        %v1211 = vsel %vm1203, %v1178, %v931
        %v1213 = vsel %vm1203, %v1180, %v933
        %v1215 = vsel %vm1203, %v1182, %v935
        %v1217 = vsel %vm1203, %v1184, %v937
        %v1219 = vsel %vm1203, %v1186, %v939
        %v1221 = vsel %vm1203, %v1188, %v941
        %v1223 = vsel %vm1203, %v1190, %v943
        %v1225 = vsel %vm1203, %v1192, %v945
        %v1227 = vsel %vm1203, %v1194, %v947
        %v1229 = vsel %vm1203, %v1196, %v949
        %v1231 = vsel %vm1203, %v1198, %v951
        %v1233 = vsel %vm1203, %v1200, %v953
        %v1235 = vsel %vm1203, %v1202, %v955
        %v1236 = vld [vmem:[#allocation5] sm:$0xf]
        %v1237 = vld [vmem:[#allocation5 + $0x4] sm:$0xf]
        %v1238 = vld [vmem:[#allocation5 + $0x8] sm:$0xf]
        %v1239 = vld [vmem:[#allocation5 + $0xc] sm:$0x3]
        %v1244 = vunpack.c.l.b16 %v1236
        %v1245 = vunpack.c.l.b16 %v1237
        %v1246 = vunpack.c.l.b16 %v1238
        %v1247 = vunpack.c.l.b16 %v1239
        %v1248 = vpack.c.b16 %v1245, %v1244
        %v1249 = vpack.c.b16 %v1247, %v1246
        %vm1251 = vcmask 220160
        %v1252 = vsel %vm1251, %v1205, 0
        %v1254 = vsel %vm1251, %v1207, 0
        %v1256 = vsel %vm1251, %v1209, 0
        %v1258 = vsel %vm1251, %v1211, 0
        %v1260 = vsel %vm1251, %v1213, 0
        %v1262 = vsel %vm1251, %v1215, 0
        %v1264 = vsel %vm1251, %v1217, 0
        %v1266 = vsel %vm1251, %v1219, 0
        %v1268 = vsel %vm1251, %v1221, 0
        %v1270 = vsel %vm1251, %v1223, 0
        %v1272 = vsel %vm1251, %v1225, 0
        %v1274 = vsel %vm1251, %v1227, 0
        %v1276 = vsel %vm1251, %v1229, 0
        %v1278 = vsel %vm1251, %v1231, 0
        %v1280 = vsel %vm1251, %v1233, 0
        %v1282 = vsel %vm1251, %v1235, 0
        %vm1284 = vcmask 1044480
        %vm1285 = vcmask 1045504
        %v1286 = vsel %vm1284, 4294967295, 65535
        %v1287 = vsel %vm1285, %v1286, 0
        %v1289 = vand.u32 %v1249, %v1287
        %1291 = vmatprep.subr.bf16.mxu0 0
        %1292 = vmatpush1.bf16.msra.mxu0 %v1248
        %1293 = vmatprep.subr.bf16.mxu0 0
        %1294 = vmatpush1.bf16.msra.mxu0 %v1289
        %1295 = vmatprep.subr.bf16.mxu0 0
        %1296 = vmatpush1.bf16.msra.mxu0 0
        %1297 = vmatprep.subr.bf16.mxu0 0
        %1298 = vmatpush1.bf16.msra.mxu0 0
        %1299 = vmatprep.subr.bf16.mxu0 0
        %1300 = vmatpush1.bf16.msra.mxu0 0
        %1301 = vmatprep.subr.bf16.mxu0 0
        %1302 = vmatpush1.bf16.msra.mxu0 0
        %1303 = vmatprep.subr.bf16.mxu0 0
        %1304 = vmatpush1.bf16.msra.mxu0 0
        %1305 = vmatprep.subr.bf16.mxu0 0
        %1306 = vmatpush1.bf16.msra.mxu0 0
        %1307 = vmatprep.subr.bf16.mxu0 0
        %1308 = vmatpush1.bf16.msra.mxu0 0
        %1309 = vmatprep.subr.bf16.mxu0 0
        %1310 = vmatpush1.bf16.msra.mxu0 0
        %1311 = vmatprep.subr.bf16.mxu0 0
        %1312 = vmatpush1.bf16.msra.mxu0 0
        %1313 = vmatprep.subr.bf16.mxu0 0
        %1314 = vmatpush1.bf16.msra.mxu0 0
        %1315 = vmatprep.subr.bf16.mxu0 0
        %1316 = vmatpush1.bf16.msra.mxu0 0
        %1317 = vmatprep.subr.bf16.mxu0 0
        %1318 = vmatpush1.bf16.msra.mxu0 0
        %1319 = vmatprep.subr.bf16.mxu0 0
        %1320 = vmatpush1.bf16.msra.mxu0 0
        %1321 = vmatprep.subr.bf16.mxu0 0
        %1322 = vmatpush1.bf16.msra.mxu0 0
        %1323 = vmatprep.mubr.bf16.mxu0 0
        %1324 = vmatmul.mubr.bf16.gmra.mrb[0].mxu0 %v1252
        %v1325 = vpop.f32.mrb[0].mxu0
        %v1326 = vadd.f32 0.0, %v1325
        %v1327 = vpop.f32.mrb[0].mxu0
        %v1328 = vpop.f32.mrb[0].mxu0
        %v1329 = vadd.f32 0.0, %v1328
        %v1330 = vpop.f32.mrb[0].mxu0
        %1331 = vmatprep.mubr.bf16.mxu0 0
        %1332 = vmatmul.mubr.bf16.gmra.mrb[0].mxu0 %v1254
        %v1333 = vpop.f32.mrb[0].mxu0
        %v1334 = vadd.f32 0.0, %v1333
        %v1335 = vpop.f32.mrb[0].mxu0
        %v1336 = vpop.f32.mrb[0].mxu0
        %v1337 = vadd.f32 0.0, %v1336
        %v1338 = vpop.f32.mrb[0].mxu0
        %1339 = vmatprep.mubr.bf16.mxu0 0
        %1340 = vmatmul.mubr.bf16.gmra.mrb[0].mxu0 %v1256
        %v1341 = vpop.f32.mrb[0].mxu0
        %v1342 = vadd.f32 0.0, %v1341
        %v1343 = vpop.f32.mrb[0].mxu0
        %v1344 = vpop.f32.mrb[0].mxu0
        %v1345 = vadd.f32 0.0, %v1344
        %v1346 = vpop.f32.mrb[0].mxu0
        %1347 = vmatprep.mubr.bf16.mxu0 0
        %1348 = vmatmul.mubr.bf16.gmra.mrb[0].mxu0 %v1258
        %v1349 = vpop.f32.mrb[0].mxu0
        %v1350 = vadd.f32 0.0, %v1349
        %v1351 = vpop.f32.mrb[0].mxu0
        %v1352 = vpop.f32.mrb[0].mxu0
        %v1353 = vadd.f32 0.0, %v1352
        %v1354 = vpop.f32.mrb[0].mxu0
        %1355 = vmatprep.mubr.bf16.mxu0 0
        %1356 = vmatmul.mubr.bf16.gmra.mrb[0].mxu0 %v1260
        %v1357 = vpop.f32.mrb[0].mxu0
        %v1358 = vadd.f32 0.0, %v1357
        %v1359 = vpop.f32.mrb[0].mxu0
        %v1360 = vpop.f32.mrb[0].mxu0
        %v1361 = vadd.f32 0.0, %v1360
        %v1362 = vpop.f32.mrb[0].mxu0
        %1363 = vmatprep.mubr.bf16.mxu0 0
        %1364 = vmatmul.mubr.bf16.gmra.mrb[0].mxu0 %v1262
        %v1365 = vpop.f32.mrb[0].mxu0
        %v1366 = vadd.f32 0.0, %v1365
        %v1367 = vpop.f32.mrb[0].mxu0
        %v1368 = vpop.f32.mrb[0].mxu0
        %v1369 = vadd.f32 0.0, %v1368
        %v1370 = vpop.f32.mrb[0].mxu0
        %1371 = vmatprep.mubr.bf16.mxu0 0
        %1372 = vmatmul.mubr.bf16.gmra.mrb[0].mxu0 %v1264
        %v1373 = vpop.f32.mrb[0].mxu0
        %v1374 = vadd.f32 0.0, %v1373
        %v1375 = vpop.f32.mrb[0].mxu0
        %v1376 = vpop.f32.mrb[0].mxu0
        %v1377 = vadd.f32 0.0, %v1376
        %v1378 = vpop.f32.mrb[0].mxu0
        %1379 = vmatprep.mubr.bf16.mxu0 0
        %1380 = vmatmul.mubr.bf16.gmra.mrb[0].mxu0 %v1266
        %v1381 = vpop.f32.mrb[0].mxu0
        %v1382 = vadd.f32 0.0, %v1381
        %v1383 = vpop.f32.mrb[0].mxu0
        %v1384 = vpop.f32.mrb[0].mxu0
        %v1385 = vadd.f32 0.0, %v1384
        %v1386 = vpop.f32.mrb[0].mxu0
        %1387 = vmatprep.mubr.bf16.mxu0 0
        %1388 = vmatmul.mubr.bf16.gmra.mrb[0].mxu0 %v1268
        %v1389 = vpop.f32.mrb[0].mxu0
        %v1390 = vadd.f32 0.0, %v1389
        %v1391 = vpop.f32.mrb[0].mxu0
        %v1392 = vpop.f32.mrb[0].mxu0
        %v1393 = vadd.f32 0.0, %v1392
        %v1394 = vpop.f32.mrb[0].mxu0
        %1395 = vmatprep.mubr.bf16.mxu0 0
        %1396 = vmatmul.mubr.bf16.gmra.mrb[0].mxu0 %v1270
        %v1397 = vpop.f32.mrb[0].mxu0
        %v1398 = vadd.f32 0.0, %v1397
        %v1399 = vpop.f32.mrb[0].mxu0
        %v1400 = vpop.f32.mrb[0].mxu0
        %v1401 = vadd.f32 0.0, %v1400
        %v1402 = vpop.f32.mrb[0].mxu0
        %1403 = vmatprep.mubr.bf16.mxu0 0
        %1404 = vmatmul.mubr.bf16.gmra.mrb[0].mxu0 %v1272
        %v1405 = vpop.f32.mrb[0].mxu0
        %v1406 = vadd.f32 0.0, %v1405
        %v1407 = vpop.f32.mrb[0].mxu0
        %v1408 = vpop.f32.mrb[0].mxu0
        %v1409 = vadd.f32 0.0, %v1408
        %v1410 = vpop.f32.mrb[0].mxu0
        %1411 = vmatprep.mubr.bf16.mxu0 0
        %1412 = vmatmul.mubr.bf16.gmra.mrb[0].mxu0 %v1274
        %v1413 = vpop.f32.mrb[0].mxu0
        %v1414 = vadd.f32 0.0, %v1413
        %v1415 = vpop.f32.mrb[0].mxu0
        %v1416 = vpop.f32.mrb[0].mxu0
        %v1417 = vadd.f32 0.0, %v1416
        %v1418 = vpop.f32.mrb[0].mxu0
        %1419 = vmatprep.mubr.bf16.mxu0 0
        %1420 = vmatmul.mubr.bf16.gmra.mrb[0].mxu0 %v1276
        %v1421 = vpop.f32.mrb[0].mxu0
        %v1422 = vadd.f32 0.0, %v1421
        %v1423 = vpop.f32.mrb[0].mxu0
        %v1424 = vpop.f32.mrb[0].mxu0
        %v1425 = vadd.f32 0.0, %v1424
        %v1426 = vpop.f32.mrb[0].mxu0
        %1427 = vmatprep.mubr.bf16.mxu0 0
        %1428 = vmatmul.mubr.bf16.gmra.mrb[0].mxu0 %v1278
        %v1429 = vpop.f32.mrb[0].mxu0
        %v1430 = vadd.f32 0.0, %v1429
        %v1431 = vpop.f32.mrb[0].mxu0
        %v1432 = vpop.f32.mrb[0].mxu0
        %v1433 = vadd.f32 0.0, %v1432
        %v1434 = vpop.f32.mrb[0].mxu0
        %1435 = vmatprep.mubr.bf16.mxu0 0
        %1436 = vmatmul.mubr.bf16.gmra.mrb[0].mxu0 %v1280
        %v1437 = vpop.f32.mrb[0].mxu0
        %v1438 = vadd.f32 0.0, %v1437
        %v1439 = vpop.f32.mrb[0].mxu0
        %v1440 = vpop.f32.mrb[0].mxu0
        %v1441 = vadd.f32 0.0, %v1440
        %v1442 = vpop.f32.mrb[0].mxu0
        %1443 = vmatprep.mubr.bf16.mxu0 0
        %1444 = vmatmul.mubr.bf16.gmra.mrb[0].mxu0 %v1282
        %v1445 = vpop.f32.mrb[0].mxu0
        %v1446 = vadd.f32 0.0, %v1445
        %v1447 = vpop.f32.mrb[0].mxu0
        %v1448 = vpop.f32.mrb[0].mxu0
        %v1449 = vadd.f32 0.0, %v1448
        %v1450 = vpop.f32.mrb[0].mxu0
        %1451 = vdwg.mxu0
        %v1452 = vld [vmem:[#allocation7] sm:$0x1]
        %v1454 = vlaneseq
        %v1455 = vshrl.u32 %v1454, 7
        %v1456 = vsub.s32 0, %v1455
        %v1457 = vrot.slane %v1452, %v1456
        %v1459 = vmul.f32 %v1326, %v1457
        %v1460 = vmul.f32 %v1329, %v1457
        %v1461 = vmul.f32 %v1334, %v1457
        %v1462 = vmul.f32 %v1337, %v1457
        %v1463 = vmul.f32 %v1342, %v1457
        %v1464 = vmul.f32 %v1345, %v1457
        %v1465 = vmul.f32 %v1350, %v1457
        %v1466 = vmul.f32 %v1353, %v1457
        %v1467 = vmul.f32 %v1358, %v1457
        %v1468 = vmul.f32 %v1361, %v1457
        %v1469 = vmul.f32 %v1366, %v1457
        %v1470 = vmul.f32 %v1369, %v1457
        %v1471 = vmul.f32 %v1374, %v1457
        %v1472 = vmul.f32 %v1377, %v1457
        %v1473 = vmul.f32 %v1382, %v1457
        %v1474 = vmul.f32 %v1385, %v1457
        %v1475 = vmul.f32 %v1390, %v1457
        %v1476 = vmul.f32 %v1393, %v1457
        %v1477 = vmul.f32 %v1398, %v1457
        %v1478 = vmul.f32 %v1401, %v1457
        %v1479 = vmul.f32 %v1406, %v1457
        %v1480 = vmul.f32 %v1409, %v1457
        %v1481 = vmul.f32 %v1414, %v1457
        %v1482 = vmul.f32 %v1417, %v1457
        %v1483 = vmul.f32 %v1422, %v1457
        %v1484 = vmul.f32 %v1425, %v1457
        %v1485 = vmul.f32 %v1430, %v1457
        %v1486 = vmul.f32 %v1433, %v1457
        %v1487 = vmul.f32 %v1438, %v1457
        %v1488 = vmul.f32 %v1441, %v1457
        %v1489 = vmul.f32 %v1446, %v1457
        %v1490 = vmul.f32 %v1449, %v1457
        %v1491 = vld [vmem:[#allocation8] sm:$0x1]
        %v1493 = vlaneseq
        %v1494 = vshrl.u32 %v1493, 7
        %v1495 = vsub.s32 0, %v1494
        %v1496 = vrot.slane %v1491, %v1495
        %v1498 = vadd.f32 %v1459, %v1496
        %v1499 = vadd.f32 %v1460, %v1496
        %v1500 = vadd.f32 %v1461, %v1496
        %v1501 = vadd.f32 %v1462, %v1496
        %v1502 = vadd.f32 %v1463, %v1496
        %v1503 = vadd.f32 %v1464, %v1496
        %v1504 = vadd.f32 %v1465, %v1496
        %v1505 = vadd.f32 %v1466, %v1496
        %v1506 = vadd.f32 %v1467, %v1496
        %v1507 = vadd.f32 %v1468, %v1496
        %v1508 = vadd.f32 %v1469, %v1496
        %v1509 = vadd.f32 %v1470, %v1496
        %v1510 = vadd.f32 %v1471, %v1496
        %v1511 = vadd.f32 %v1472, %v1496
        %v1512 = vadd.f32 %v1473, %v1496
        %v1513 = vadd.f32 %v1474, %v1496
        %v1514 = vadd.f32 %v1475, %v1496
        %v1515 = vadd.f32 %v1476, %v1496
        %v1516 = vadd.f32 %v1477, %v1496
        %v1517 = vadd.f32 %v1478, %v1496
        %v1518 = vadd.f32 %v1479, %v1496
        %v1519 = vadd.f32 %v1480, %v1496
        %v1520 = vadd.f32 %v1481, %v1496
        %v1521 = vadd.f32 %v1482, %v1496
        %v1522 = vadd.f32 %v1483, %v1496
        %v1523 = vadd.f32 %v1484, %v1496
        %v1524 = vadd.f32 %v1485, %v1496
        %v1525 = vadd.f32 %v1486, %v1496
        %v1526 = vadd.f32 %v1487, %v1496
        %v1527 = vadd.f32 %v1488, %v1496
        %v1528 = vadd.f32 %v1489, %v1496
        %v1529 = vadd.f32 %v1490, %v1496
        %v1530 = vmax.f32 %v1498, 0.0
        %v1531 = vmax.f32 %v1499, 0.0
        %v1532 = vmax.f32 %v1500, 0.0
        %v1533 = vmax.f32 %v1501, 0.0
        %v1534 = vmax.f32 %v1502, 0.0
        %v1535 = vmax.f32 %v1503, 0.0
        %v1536 = vmax.f32 %v1504, 0.0
        %v1537 = vmax.f32 %v1505, 0.0
        %v1538 = vmax.f32 %v1506, 0.0
        %v1539 = vmax.f32 %v1507, 0.0
        %v1540 = vmax.f32 %v1508, 0.0
        %v1541 = vmax.f32 %v1509, 0.0
        %v1542 = vmax.f32 %v1510, 0.0
        %v1543 = vmax.f32 %v1511, 0.0
        %v1544 = vmax.f32 %v1512, 0.0
        %v1545 = vmax.f32 %v1513, 0.0
        %v1546 = vmax.f32 %v1514, 0.0
        %v1547 = vmax.f32 %v1515, 0.0
        %v1548 = vmax.f32 %v1516, 0.0
        %v1549 = vmax.f32 %v1517, 0.0
        %v1550 = vmax.f32 %v1518, 0.0
        %v1551 = vmax.f32 %v1519, 0.0
        %v1552 = vmax.f32 %v1520, 0.0
        %v1553 = vmax.f32 %v1521, 0.0
        %v1554 = vmax.f32 %v1522, 0.0
        %v1555 = vmax.f32 %v1523, 0.0
        %v1556 = vmax.f32 %v1524, 0.0
        %v1557 = vmax.f32 %v1525, 0.0
        %v1558 = vmax.f32 %v1526, 0.0
        %v1559 = vmax.f32 %v1527, 0.0
        %v1560 = vmax.f32 %v1528, 0.0
        %v1561 = vmax.f32 %v1529, 0.0
        %v1594 = vcombine.high %v1530, %v1530
        %v1596 = vunpack.c.l.s4 1983009808
        %v1597 = vunpack.c.0.s8 %v1596
        %v1598 = vlaneseq
        %v1599 = vshrl.u32 %v1598, 7
        %v1600 = vsub.s32 %v1597, %v1599
        %v1601 = vrot.slane %v1530, %v1600
        %v1603 = vunpack.c.l.s4 1983009808
        %v1604 = vunpack.c.0.s8 %v1603
        %v1605 = vlaneseq
        %v1606 = vshrl.u32 %v1605, 7
        %v1607 = vsub.s32 %v1604, %v1606
        %v1608 = vrot.slane %v1594, %v1607
        %v1609 = vcombine.high %v1601, %v1601
        %v1610 = vcombine.high %v1608, %v1608
        %v1611 = vcombine.high %v1531, %v1531
        %v1613 = vunpack.c.l.s4 1983009808
        %v1614 = vunpack.c.0.s8 %v1613
        %v1615 = vlaneseq
        %v1616 = vshrl.u32 %v1615, 7
        %v1617 = vsub.s32 %v1614, %v1616
        %v1618 = vrot.slane %v1531, %v1617
        %v1620 = vunpack.c.l.s4 1983009808
        %v1621 = vunpack.c.0.s8 %v1620
        %v1622 = vlaneseq
        %v1623 = vshrl.u32 %v1622, 7
        %v1624 = vsub.s32 %v1621, %v1623
        %v1625 = vrot.slane %v1611, %v1624
        %v1626 = vcombine.high %v1618, %v1618
        %v1627 = vcombine.high %v1625, %v1625
        %v1628 = vcombine.high %v1532, %v1532
        %v1630 = vunpack.c.l.s4 1983009808
        %v1631 = vunpack.c.0.s8 %v1630
        %v1632 = vlaneseq
        %v1633 = vshrl.u32 %v1632, 7
        %v1634 = vsub.s32 %v1631, %v1633
        %v1635 = vrot.slane %v1532, %v1634
        %v1637 = vunpack.c.l.s4 1983009808
        %v1638 = vunpack.c.0.s8 %v1637
        %v1639 = vlaneseq
        %v1640 = vshrl.u32 %v1639, 7
        %v1641 = vsub.s32 %v1638, %v1640
        %v1642 = vrot.slane %v1628, %v1641
        %v1643 = vcombine.high %v1635, %v1635
        %v1644 = vcombine.high %v1642, %v1642
        %v1645 = vcombine.high %v1533, %v1533
        %v1647 = vunpack.c.l.s4 1983009808
        %v1648 = vunpack.c.0.s8 %v1647
        %v1649 = vlaneseq
        %v1650 = vshrl.u32 %v1649, 7
        %v1651 = vsub.s32 %v1648, %v1650
        %v1652 = vrot.slane %v1533, %v1651
        %v1654 = vunpack.c.l.s4 1983009808
        %v1655 = vunpack.c.0.s8 %v1654
        %v1656 = vlaneseq
        %v1657 = vshrl.u32 %v1656, 7
        %v1658 = vsub.s32 %v1655, %v1657
        %v1659 = vrot.slane %v1645, %v1658
        %v1660 = vcombine.high %v1652, %v1652
        %v1661 = vcombine.high %v1659, %v1659
        %v1662 = vcombine.high %v1534, %v1534
        %v1664 = vunpack.c.l.s4 1983009808
        %v1665 = vunpack.c.0.s8 %v1664
        %v1666 = vlaneseq
        %v1667 = vshrl.u32 %v1666, 7
        %v1668 = vsub.s32 %v1665, %v1667
        %v1669 = vrot.slane %v1534, %v1668
        %v1671 = vunpack.c.l.s4 1983009808
        %v1672 = vunpack.c.0.s8 %v1671
        %v1673 = vlaneseq
        %v1674 = vshrl.u32 %v1673, 7
        %v1675 = vsub.s32 %v1672, %v1674
        %v1676 = vrot.slane %v1662, %v1675
        %v1677 = vcombine.high %v1669, %v1669
        %v1678 = vcombine.high %v1676, %v1676
        %v1679 = vcombine.high %v1535, %v1535
        %v1681 = vunpack.c.l.s4 1983009808
        %v1682 = vunpack.c.0.s8 %v1681
        %v1683 = vlaneseq
        %v1684 = vshrl.u32 %v1683, 7
        %v1685 = vsub.s32 %v1682, %v1684
        %v1686 = vrot.slane %v1535, %v1685
        %v1688 = vunpack.c.l.s4 1983009808
        %v1689 = vunpack.c.0.s8 %v1688
        %v1690 = vlaneseq
        %v1691 = vshrl.u32 %v1690, 7
        %v1692 = vsub.s32 %v1689, %v1691
        %v1693 = vrot.slane %v1679, %v1692
        %v1694 = vcombine.high %v1686, %v1686
        %v1695 = vcombine.high %v1693, %v1693
        %v1696 = vcombine.high %v1536, %v1536
        %v1698 = vunpack.c.l.s4 1983009808
        %v1699 = vunpack.c.0.s8 %v1698
        %v1700 = vlaneseq
        %v1701 = vshrl.u32 %v1700, 7
        %v1702 = vsub.s32 %v1699, %v1701
        %v1703 = vrot.slane %v1536, %v1702
        %v1705 = vunpack.c.l.s4 1983009808
        %v1706 = vunpack.c.0.s8 %v1705
        %v1707 = vlaneseq
        %v1708 = vshrl.u32 %v1707, 7
        %v1709 = vsub.s32 %v1706, %v1708
        %v1710 = vrot.slane %v1696, %v1709
        %v1711 = vcombine.high %v1703, %v1703
        %v1712 = vcombine.high %v1710, %v1710
        %v1713 = vcombine.high %v1537, %v1537
        %v1715 = vunpack.c.l.s4 1983009808
        %v1716 = vunpack.c.0.s8 %v1715
        %v1717 = vlaneseq
        %v1718 = vshrl.u32 %v1717, 7
        %v1719 = vsub.s32 %v1716, %v1718
        %v1720 = vrot.slane %v1537, %v1719
        %v1722 = vunpack.c.l.s4 1983009808
        %v1723 = vunpack.c.0.s8 %v1722
        %v1724 = vlaneseq
        %v1725 = vshrl.u32 %v1724, 7
        %v1726 = vsub.s32 %v1723, %v1725
        %v1727 = vrot.slane %v1713, %v1726
        %v1728 = vcombine.high %v1720, %v1720
        %v1729 = vcombine.high %v1727, %v1727
        %v1730 = vcombine.high %v1538, %v1538
        %v1732 = vunpack.c.l.s4 1983009808
        %v1733 = vunpack.c.0.s8 %v1732
        %v1734 = vlaneseq
        %v1735 = vshrl.u32 %v1734, 7
        %v1736 = vsub.s32 %v1733, %v1735
        %v1737 = vrot.slane %v1538, %v1736
        %v1739 = vunpack.c.l.s4 1983009808
        %v1740 = vunpack.c.0.s8 %v1739
        %v1741 = vlaneseq
        %v1742 = vshrl.u32 %v1741, 7
        %v1743 = vsub.s32 %v1740, %v1742
        %v1744 = vrot.slane %v1730, %v1743
        %v1745 = vcombine.high %v1737, %v1737
        %v1746 = vcombine.high %v1744, %v1744
        %v1747 = vcombine.high %v1539, %v1539
        %v1749 = vunpack.c.l.s4 1983009808
        %v1750 = vunpack.c.0.s8 %v1749
        %v1751 = vlaneseq
        %v1752 = vshrl.u32 %v1751, 7
        %v1753 = vsub.s32 %v1750, %v1752
        %v1754 = vrot.slane %v1539, %v1753
        %v1756 = vunpack.c.l.s4 1983009808
        %v1757 = vunpack.c.0.s8 %v1756
        %v1758 = vlaneseq
        %v1759 = vshrl.u32 %v1758, 7
        %v1760 = vsub.s32 %v1757, %v1759
        %v1761 = vrot.slane %v1747, %v1760
        %v1762 = vcombine.high %v1754, %v1754
        %v1763 = vcombine.high %v1761, %v1761
        %v1764 = vcombine.high %v1540, %v1540
        %v1766 = vunpack.c.l.s4 1983009808
        %v1767 = vunpack.c.0.s8 %v1766
        %v1768 = vlaneseq
        %v1769 = vshrl.u32 %v1768, 7
        %v1770 = vsub.s32 %v1767, %v1769
        %v1771 = vrot.slane %v1540, %v1770
        %v1773 = vunpack.c.l.s4 1983009808
        %v1774 = vunpack.c.0.s8 %v1773
        %v1775 = vlaneseq
        %v1776 = vshrl.u32 %v1775, 7
        %v1777 = vsub.s32 %v1774, %v1776
        %v1778 = vrot.slane %v1764, %v1777
        %v1779 = vcombine.high %v1771, %v1771
        %v1780 = vcombine.high %v1778, %v1778
        %v1781 = vcombine.high %v1541, %v1541
        %v1783 = vunpack.c.l.s4 1983009808
        %v1784 = vunpack.c.0.s8 %v1783
        %v1785 = vlaneseq
        %v1786 = vshrl.u32 %v1785, 7
        %v1787 = vsub.s32 %v1784, %v1786
        %v1788 = vrot.slane %v1541, %v1787
        %v1790 = vunpack.c.l.s4 1983009808
        %v1791 = vunpack.c.0.s8 %v1790
        %v1792 = vlaneseq
        %v1793 = vshrl.u32 %v1792, 7
        %v1794 = vsub.s32 %v1791, %v1793
        %v1795 = vrot.slane %v1781, %v1794
        %v1796 = vcombine.high %v1788, %v1788
        %v1797 = vcombine.high %v1795, %v1795
        %v1798 = vcombine.high %v1542, %v1542
        %v1800 = vunpack.c.l.s4 1983009808
        %v1801 = vunpack.c.0.s8 %v1800
        %v1802 = vlaneseq
        %v1803 = vshrl.u32 %v1802, 7
        %v1804 = vsub.s32 %v1801, %v1803
        %v1805 = vrot.slane %v1542, %v1804
        %v1807 = vunpack.c.l.s4 1983009808
        %v1808 = vunpack.c.0.s8 %v1807
        %v1809 = vlaneseq
        %v1810 = vshrl.u32 %v1809, 7
        %v1811 = vsub.s32 %v1808, %v1810
        %v1812 = vrot.slane %v1798, %v1811
        %v1813 = vcombine.high %v1805, %v1805
        %v1814 = vcombine.high %v1812, %v1812
        %v1815 = vcombine.high %v1543, %v1543
        %v1817 = vunpack.c.l.s4 1983009808
        %v1818 = vunpack.c.0.s8 %v1817
        %v1819 = vlaneseq
        %v1820 = vshrl.u32 %v1819, 7
        %v1821 = vsub.s32 %v1818, %v1820
        %v1822 = vrot.slane %v1543, %v1821
        %v1824 = vunpack.c.l.s4 1983009808
        %v1825 = vunpack.c.0.s8 %v1824
        %v1826 = vlaneseq
        %v1827 = vshrl.u32 %v1826, 7
        %v1828 = vsub.s32 %v1825, %v1827
        %v1829 = vrot.slane %v1815, %v1828
        %v1830 = vcombine.high %v1822, %v1822
        %v1831 = vcombine.high %v1829, %v1829
        %v1832 = vcombine.high %v1544, %v1544
        %v1834 = vunpack.c.l.s4 1983009808
        %v1835 = vunpack.c.0.s8 %v1834
        %v1836 = vlaneseq
        %v1837 = vshrl.u32 %v1836, 7
        %v1838 = vsub.s32 %v1835, %v1837
        %v1839 = vrot.slane %v1544, %v1838
        %v1841 = vunpack.c.l.s4 1983009808
        %v1842 = vunpack.c.0.s8 %v1841
        %v1843 = vlaneseq
        %v1844 = vshrl.u32 %v1843, 7
        %v1845 = vsub.s32 %v1842, %v1844
        %v1846 = vrot.slane %v1832, %v1845
        %v1847 = vcombine.high %v1839, %v1839
        %v1848 = vcombine.high %v1846, %v1846
        %v1849 = vcombine.high %v1545, %v1545
        %v1851 = vunpack.c.l.s4 1983009808
        %v1852 = vunpack.c.0.s8 %v1851
        %v1853 = vlaneseq
        %v1854 = vshrl.u32 %v1853, 7
        %v1855 = vsub.s32 %v1852, %v1854
        %v1856 = vrot.slane %v1545, %v1855
        %v1858 = vunpack.c.l.s4 1983009808
        %v1859 = vunpack.c.0.s8 %v1858
        %v1860 = vlaneseq
        %v1861 = vshrl.u32 %v1860, 7
        %v1862 = vsub.s32 %v1859, %v1861
        %v1863 = vrot.slane %v1849, %v1862
        %v1864 = vcombine.high %v1856, %v1856
        %v1865 = vcombine.high %v1863, %v1863
        %v1866 = vcombine.high %v1546, %v1546
        %v1868 = vunpack.c.l.s4 1983009808
        %v1869 = vunpack.c.0.s8 %v1868
        %v1870 = vlaneseq
        %v1871 = vshrl.u32 %v1870, 7
        %v1872 = vsub.s32 %v1869, %v1871
        %v1873 = vrot.slane %v1546, %v1872
        %v1875 = vunpack.c.l.s4 1983009808
        %v1876 = vunpack.c.0.s8 %v1875
        %v1877 = vlaneseq
        %v1878 = vshrl.u32 %v1877, 7
        %v1879 = vsub.s32 %v1876, %v1878
        %v1880 = vrot.slane %v1866, %v1879
        %v1881 = vcombine.high %v1873, %v1873
        %v1882 = vcombine.high %v1880, %v1880
        %v1883 = vcombine.high %v1547, %v1547
        %v1885 = vunpack.c.l.s4 1983009808
        %v1886 = vunpack.c.0.s8 %v1885
        %v1887 = vlaneseq
        %v1888 = vshrl.u32 %v1887, 7
        %v1889 = vsub.s32 %v1886, %v1888
        %v1890 = vrot.slane %v1547, %v1889
        %v1892 = vunpack.c.l.s4 1983009808
        %v1893 = vunpack.c.0.s8 %v1892
        %v1894 = vlaneseq
        %v1895 = vshrl.u32 %v1894, 7
        %v1896 = vsub.s32 %v1893, %v1895
        %v1897 = vrot.slane %v1883, %v1896
        %v1898 = vcombine.high %v1890, %v1890
        %v1899 = vcombine.high %v1897, %v1897
        %v1900 = vcombine.high %v1548, %v1548
        %v1902 = vunpack.c.l.s4 1983009808
        %v1903 = vunpack.c.0.s8 %v1902
        %v1904 = vlaneseq
        %v1905 = vshrl.u32 %v1904, 7
        %v1906 = vsub.s32 %v1903, %v1905
        %v1907 = vrot.slane %v1548, %v1906
        %v1909 = vunpack.c.l.s4 1983009808
        %v1910 = vunpack.c.0.s8 %v1909
        %v1911 = vlaneseq
        %v1912 = vshrl.u32 %v1911, 7
        %v1913 = vsub.s32 %v1910, %v1912
        %v1914 = vrot.slane %v1900, %v1913
        %v1915 = vcombine.high %v1907, %v1907
        %v1916 = vcombine.high %v1914, %v1914
        %v1917 = vcombine.high %v1549, %v1549
        %v1919 = vunpack.c.l.s4 1983009808
        %v1920 = vunpack.c.0.s8 %v1919
        %v1921 = vlaneseq
        %v1922 = vshrl.u32 %v1921, 7
        %v1923 = vsub.s32 %v1920, %v1922
        %v1924 = vrot.slane %v1549, %v1923
        %v1926 = vunpack.c.l.s4 1983009808
        %v1927 = vunpack.c.0.s8 %v1926
        %v1928 = vlaneseq
        %v1929 = vshrl.u32 %v1928, 7
        %v1930 = vsub.s32 %v1927, %v1929
        %v1931 = vrot.slane %v1917, %v1930
        %v1932 = vcombine.high %v1924, %v1924
        %v1933 = vcombine.high %v1931, %v1931
        %v1934 = vcombine.high %v1550, %v1550
        %v1936 = vunpack.c.l.s4 1983009808
        %v1937 = vunpack.c.0.s8 %v1936
        %v1938 = vlaneseq
        %v1939 = vshrl.u32 %v1938, 7
        %v1940 = vsub.s32 %v1937, %v1939
        %v1941 = vrot.slane %v1550, %v1940
        %v1943 = vunpack.c.l.s4 1983009808
        %v1944 = vunpack.c.0.s8 %v1943
        %v1945 = vlaneseq
        %v1946 = vshrl.u32 %v1945, 7
        %v1947 = vsub.s32 %v1944, %v1946
        %v1948 = vrot.slane %v1934, %v1947
        %v1949 = vcombine.high %v1941, %v1941
        %v1950 = vcombine.high %v1948, %v1948
        %v1951 = vcombine.high %v1551, %v1551
        %v1953 = vunpack.c.l.s4 1983009808
        %v1954 = vunpack.c.0.s8 %v1953
        %v1955 = vlaneseq
        %v1956 = vshrl.u32 %v1955, 7
        %v1957 = vsub.s32 %v1954, %v1956
        %v1958 = vrot.slane %v1551, %v1957
        %v1960 = vunpack.c.l.s4 1983009808
        %v1961 = vunpack.c.0.s8 %v1960
        %v1962 = vlaneseq
        %v1963 = vshrl.u32 %v1962, 7
        %v1964 = vsub.s32 %v1961, %v1963
        %v1965 = vrot.slane %v1951, %v1964
        %v1966 = vcombine.high %v1958, %v1958
        %v1967 = vcombine.high %v1965, %v1965
        %v1968 = vcombine.high %v1552, %v1552
        %v1970 = vunpack.c.l.s4 1983009808
        %v1971 = vunpack.c.0.s8 %v1970
        %v1972 = vlaneseq
        %v1973 = vshrl.u32 %v1972, 7
        %v1974 = vsub.s32 %v1971, %v1973
        %v1975 = vrot.slane %v1552, %v1974
        %v1977 = vunpack.c.l.s4 1983009808
        %v1978 = vunpack.c.0.s8 %v1977
        %v1979 = vlaneseq
        %v1980 = vshrl.u32 %v1979, 7
        %v1981 = vsub.s32 %v1978, %v1980
        %v1982 = vrot.slane %v1968, %v1981
        %v1983 = vcombine.high %v1975, %v1975
        %v1984 = vcombine.high %v1982, %v1982
        %v1985 = vcombine.high %v1553, %v1553
        %v1987 = vunpack.c.l.s4 1983009808
        %v1988 = vunpack.c.0.s8 %v1987
        %v1989 = vlaneseq
        %v1990 = vshrl.u32 %v1989, 7
        %v1991 = vsub.s32 %v1988, %v1990
        %v1992 = vrot.slane %v1553, %v1991
        %v1994 = vunpack.c.l.s4 1983009808
        %v1995 = vunpack.c.0.s8 %v1994
        %v1996 = vlaneseq
        %v1997 = vshrl.u32 %v1996, 7
        %v1998 = vsub.s32 %v1995, %v1997
        %v1999 = vrot.slane %v1985, %v1998
        %v2000 = vcombine.high %v1992, %v1992
        %v2001 = vcombine.high %v1999, %v1999
        %v2002 = vcombine.high %v1554, %v1554
        %v2004 = vunpack.c.l.s4 1983009808
        %v2005 = vunpack.c.0.s8 %v2004
        %v2006 = vlaneseq
        %v2007 = vshrl.u32 %v2006, 7
        %v2008 = vsub.s32 %v2005, %v2007
        %v2009 = vrot.slane %v1554, %v2008
        %v2011 = vunpack.c.l.s4 1983009808
        %v2012 = vunpack.c.0.s8 %v2011
        %v2013 = vlaneseq
        %v2014 = vshrl.u32 %v2013, 7
        %v2015 = vsub.s32 %v2012, %v2014
        %v2016 = vrot.slane %v2002, %v2015
        %v2017 = vcombine.high %v2009, %v2009
        %v2018 = vcombine.high %v2016, %v2016
        %v2019 = vcombine.high %v1555, %v1555
        %v2021 = vunpack.c.l.s4 1983009808
        %v2022 = vunpack.c.0.s8 %v2021
        %v2023 = vlaneseq
        %v2024 = vshrl.u32 %v2023, 7
        %v2025 = vsub.s32 %v2022, %v2024
        %v2026 = vrot.slane %v1555, %v2025
        %v2028 = vunpack.c.l.s4 1983009808
        %v2029 = vunpack.c.0.s8 %v2028
        %v2030 = vlaneseq
        %v2031 = vshrl.u32 %v2030, 7
        %v2032 = vsub.s32 %v2029, %v2031
        %v2033 = vrot.slane %v2019, %v2032
        %v2034 = vcombine.high %v2026, %v2026
        %v2035 = vcombine.high %v2033, %v2033
        %v2036 = vcombine.high %v1556, %v1556
        %v2038 = vunpack.c.l.s4 1983009808
        %v2039 = vunpack.c.0.s8 %v2038
        %v2040 = vlaneseq
        %v2041 = vshrl.u32 %v2040, 7
        %v2042 = vsub.s32 %v2039, %v2041
        %v2043 = vrot.slane %v1556, %v2042
        %v2045 = vunpack.c.l.s4 1983009808
        %v2046 = vunpack.c.0.s8 %v2045
        %v2047 = vlaneseq
        %v2048 = vshrl.u32 %v2047, 7
        %v2049 = vsub.s32 %v2046, %v2048
        %v2050 = vrot.slane %v2036, %v2049
        %v2051 = vcombine.high %v2043, %v2043
        %v2052 = vcombine.high %v2050, %v2050
        %v2053 = vcombine.high %v1557, %v1557
        %v2055 = vunpack.c.l.s4 1983009808
        %v2056 = vunpack.c.0.s8 %v2055
        %v2057 = vlaneseq
        %v2058 = vshrl.u32 %v2057, 7
        %v2059 = vsub.s32 %v2056, %v2058
        %v2060 = vrot.slane %v1557, %v2059
        %v2062 = vunpack.c.l.s4 1983009808
        %v2063 = vunpack.c.0.s8 %v2062
        %v2064 = vlaneseq
        %v2065 = vshrl.u32 %v2064, 7
        %v2066 = vsub.s32 %v2063, %v2065
        %v2067 = vrot.slane %v2053, %v2066
        %v2068 = vcombine.high %v2060, %v2060
        %v2069 = vcombine.high %v2067, %v2067
        %v2070 = vcombine.high %v1558, %v1558
        %v2072 = vunpack.c.l.s4 1983009808
        %v2073 = vunpack.c.0.s8 %v2072
        %v2074 = vlaneseq
        %v2075 = vshrl.u32 %v2074, 7
        %v2076 = vsub.s32 %v2073, %v2075
        %v2077 = vrot.slane %v1558, %v2076
        %v2079 = vunpack.c.l.s4 1983009808
        %v2080 = vunpack.c.0.s8 %v2079
        %v2081 = vlaneseq
        %v2082 = vshrl.u32 %v2081, 7
        %v2083 = vsub.s32 %v2080, %v2082
        %v2084 = vrot.slane %v2070, %v2083
        %v2085 = vcombine.high %v2077, %v2077
        %v2086 = vcombine.high %v2084, %v2084
        %v2087 = vcombine.high %v1559, %v1559
        %v2089 = vunpack.c.l.s4 1983009808
        %v2090 = vunpack.c.0.s8 %v2089
        %v2091 = vlaneseq
        %v2092 = vshrl.u32 %v2091, 7
        %v2093 = vsub.s32 %v2090, %v2092
        %v2094 = vrot.slane %v1559, %v2093
        %v2096 = vunpack.c.l.s4 1983009808
        %v2097 = vunpack.c.0.s8 %v2096
        %v2098 = vlaneseq
        %v2099 = vshrl.u32 %v2098, 7
        %v2100 = vsub.s32 %v2097, %v2099
        %v2101 = vrot.slane %v2087, %v2100
        %v2102 = vcombine.high %v2094, %v2094
        %v2103 = vcombine.high %v2101, %v2101
        %v2104 = vcombine.high %v1560, %v1560
        %v2106 = vunpack.c.l.s4 1983009808
        %v2107 = vunpack.c.0.s8 %v2106
        %v2108 = vlaneseq
        %v2109 = vshrl.u32 %v2108, 7
        %v2110 = vsub.s32 %v2107, %v2109
        %v2111 = vrot.slane %v1560, %v2110
        %v2113 = vunpack.c.l.s4 1983009808
        %v2114 = vunpack.c.0.s8 %v2113
        %v2115 = vlaneseq
        %v2116 = vshrl.u32 %v2115, 7
        %v2117 = vsub.s32 %v2114, %v2116
        %v2118 = vrot.slane %v2104, %v2117
        %v2119 = vcombine.high %v2111, %v2111
        %v2120 = vcombine.high %v2118, %v2118
        %v2121 = vcombine.high %v1561, %v1561
        %v2123 = vunpack.c.l.s4 1983009808
        %v2124 = vunpack.c.0.s8 %v2123
        %v2125 = vlaneseq
        %v2126 = vshrl.u32 %v2125, 7
        %v2127 = vsub.s32 %v2124, %v2126
        %v2128 = vrot.slane %v1561, %v2127
        %v2130 = vunpack.c.l.s4 1983009808
        %v2131 = vunpack.c.0.s8 %v2130
        %v2132 = vlaneseq
        %v2133 = vshrl.u32 %v2132, 7
        %v2134 = vsub.s32 %v2131, %v2133
        %v2135 = vrot.slane %v2121, %v2134
        %v2136 = vcombine.high %v2128, %v2128
        %v2137 = vcombine.high %v2135, %v2135
        %v2266 = vmax.f32 %v1601, %v1635
        %v2267 = vmax.f32 %v1609, %v1643
        %v2268 = vmax.f32 %v1608, %v1642
        %v2269 = vmax.f32 %v1610, %v1644
        %v2270 = vmax.f32 %v1618, %v1652
        %v2271 = vmax.f32 %v1626, %v1660
        %v2272 = vmax.f32 %v1625, %v1659
        %v2273 = vmax.f32 %v1627, %v1661
        %v2274 = vmax.f32 %v1669, %v1703
        %v2275 = vmax.f32 %v1677, %v1711
        %v2276 = vmax.f32 %v1676, %v1710
        %v2277 = vmax.f32 %v1678, %v1712
        %v2278 = vmax.f32 %v1686, %v1720
        %v2279 = vmax.f32 %v1694, %v1728
        %v2280 = vmax.f32 %v1693, %v1727
        %v2281 = vmax.f32 %v1695, %v1729
        %v2282 = vmax.f32 %v1737, %v1771
        %v2283 = vmax.f32 %v1745, %v1779
        %v2284 = vmax.f32 %v1744, %v1778
        %v2285 = vmax.f32 %v1746, %v1780
        %v2286 = vmax.f32 %v1754, %v1788
        %v2287 = vmax.f32 %v1762, %v1796
        %v2288 = vmax.f32 %v1761, %v1795
        %v2289 = vmax.f32 %v1763, %v1797
        %v2290 = vmax.f32 %v1805, %v1839
        %v2291 = vmax.f32 %v1813, %v1847
        %v2292 = vmax.f32 %v1812, %v1846
        %v2293 = vmax.f32 %v1814, %v1848
        %v2294 = vmax.f32 %v1822, %v1856
        %v2295 = vmax.f32 %v1830, %v1864
        %v2296 = vmax.f32 %v1829, %v1863
        %v2297 = vmax.f32 %v1831, %v1865
        %v2298 = vmax.f32 %v1873, %v1907
        %v2299 = vmax.f32 %v1881, %v1915
        %v2300 = vmax.f32 %v1880, %v1914
        %v2301 = vmax.f32 %v1882, %v1916
        %v2302 = vmax.f32 %v1890, %v1924
        %v2303 = vmax.f32 %v1898, %v1932
        %v2304 = vmax.f32 %v1897, %v1931
        %v2305 = vmax.f32 %v1899, %v1933
        %v2306 = vmax.f32 %v1941, %v1975
        %v2307 = vmax.f32 %v1949, %v1983
        %v2308 = vmax.f32 %v1948, %v1982
        %v2309 = vmax.f32 %v1950, %v1984
        %v2310 = vmax.f32 %v1958, %v1992
        %v2311 = vmax.f32 %v1966, %v2000
        %v2312 = vmax.f32 %v1965, %v1999
        %v2313 = vmax.f32 %v1967, %v2001
        %v2314 = vmax.f32 %v2009, %v2043
        %v2315 = vmax.f32 %v2017, %v2051
        %v2316 = vmax.f32 %v2016, %v2050
        %v2317 = vmax.f32 %v2018, %v2052
        %v2318 = vmax.f32 %v2026, %v2060
        %v2319 = vmax.f32 %v2034, %v2068
        %v2320 = vmax.f32 %v2033, %v2067
        %v2321 = vmax.f32 %v2035, %v2069
        %v2322 = vmax.f32 %v2077, %v2111
        %v2323 = vmax.f32 %v2085, %v2119
        %v2324 = vmax.f32 %v2084, %v2118
        %v2325 = vmax.f32 %v2086, %v2120
        %v2326 = vmax.f32 %v2094, %v2128
        %v2327 = vmax.f32 %v2102, %v2136
        %v2328 = vmax.f32 %v2101, %v2135
        %v2329 = vmax.f32 %v2103, %v2137
        %vm2330 = vcmask 517120
        %v2331 = vsel %vm2330, %v2266, -inf
        %v2332 = vrot.slane %v2331, 4
        %v2333 = vmax.f32 %v2331, %v2332
        %v2334 = vrot.slane %v2333, 2
        %v2335 = vmax.f32 %v2333, %v2334
        %v2336 = vrot.slane %v2335, 1
        %v2337 = vmax.f32 %v2335, %v2336
        %v2338 = vsel %vm2330, %v2267, -inf
        %v2339 = vrot.slane %v2338, 4
        %v2340 = vmax.f32 %v2338, %v2339
        %v2341 = vrot.slane %v2340, 2
        %v2342 = vmax.f32 %v2340, %v2341
        %v2343 = vrot.slane %v2342, 1
        %v2344 = vmax.f32 %v2342, %v2343
        %v2345 = vsel %vm2330, %v2268, -inf
        %v2346 = vrot.slane %v2345, 4
        %v2347 = vmax.f32 %v2345, %v2346
        %v2348 = vrot.slane %v2347, 2
        %v2349 = vmax.f32 %v2347, %v2348
        %v2350 = vrot.slane %v2349, 1
        %v2351 = vmax.f32 %v2349, %v2350
        %v2352 = vsel %vm2330, %v2269, -inf
        %v2353 = vrot.slane %v2352, 4
        %v2354 = vmax.f32 %v2352, %v2353
        %v2355 = vrot.slane %v2354, 2
        %v2356 = vmax.f32 %v2354, %v2355
        %v2357 = vrot.slane %v2356, 1
        %v2358 = vmax.f32 %v2356, %v2357
        %v2359 = vsel %vm2330, %v2270, -inf
        %v2360 = vrot.slane %v2359, 4
        %v2361 = vmax.f32 %v2359, %v2360
        %v2362 = vrot.slane %v2361, 2
        %v2363 = vmax.f32 %v2361, %v2362
        %v2364 = vrot.slane %v2363, 1
        %v2365 = vmax.f32 %v2363, %v2364
        %v2366 = vsel %vm2330, %v2271, -inf
        %v2367 = vrot.slane %v2366, 4
        %v2368 = vmax.f32 %v2366, %v2367
        %v2369 = vrot.slane %v2368, 2
        %v2370 = vmax.f32 %v2368, %v2369
        %v2371 = vrot.slane %v2370, 1
        %v2372 = vmax.f32 %v2370, %v2371
        %v2373 = vsel %vm2330, %v2272, -inf
        %v2374 = vrot.slane %v2373, 4
        %v2375 = vmax.f32 %v2373, %v2374
        %v2376 = vrot.slane %v2375, 2
        %v2377 = vmax.f32 %v2375, %v2376
        %v2378 = vrot.slane %v2377, 1
        %v2379 = vmax.f32 %v2377, %v2378
        %v2380 = vsel %vm2330, %v2273, -inf
        %v2381 = vrot.slane %v2380, 4
        %v2382 = vmax.f32 %v2380, %v2381
        %v2383 = vrot.slane %v2382, 2
        %v2384 = vmax.f32 %v2382, %v2383
        %v2385 = vrot.slane %v2384, 1
        %v2386 = vmax.f32 %v2384, %v2385
        %v2387 = vsel %vm2330, %v2274, -inf
        %v2388 = vrot.slane %v2387, 4
        %v2389 = vmax.f32 %v2387, %v2388
        %v2390 = vrot.slane %v2389, 2
        %v2391 = vmax.f32 %v2389, %v2390
        %v2392 = vrot.slane %v2391, 1
        %v2393 = vmax.f32 %v2391, %v2392
        %v2394 = vsel %vm2330, %v2275, -inf
        %v2395 = vrot.slane %v2394, 4
        %v2396 = vmax.f32 %v2394, %v2395
        %v2397 = vrot.slane %v2396, 2
        %v2398 = vmax.f32 %v2396, %v2397
        %v2399 = vrot.slane %v2398, 1
        %v2400 = vmax.f32 %v2398, %v2399
        %v2401 = vsel %vm2330, %v2276, -inf
        %v2402 = vrot.slane %v2401, 4
        %v2403 = vmax.f32 %v2401, %v2402
        %v2404 = vrot.slane %v2403, 2
        %v2405 = vmax.f32 %v2403, %v2404
        %v2406 = vrot.slane %v2405, 1
        %v2407 = vmax.f32 %v2405, %v2406
        %v2408 = vsel %vm2330, %v2277, -inf
        %v2409 = vrot.slane %v2408, 4
        %v2410 = vmax.f32 %v2408, %v2409
        %v2411 = vrot.slane %v2410, 2
        %v2412 = vmax.f32 %v2410, %v2411
        %v2413 = vrot.slane %v2412, 1
        %v2414 = vmax.f32 %v2412, %v2413
        %v2415 = vsel %vm2330, %v2278, -inf
        %v2416 = vrot.slane %v2415, 4
        %v2417 = vmax.f32 %v2415, %v2416
        %v2418 = vrot.slane %v2417, 2
        %v2419 = vmax.f32 %v2417, %v2418
        %v2420 = vrot.slane %v2419, 1
        %v2421 = vmax.f32 %v2419, %v2420
        %v2422 = vsel %vm2330, %v2279, -inf
        %v2423 = vrot.slane %v2422, 4
        %v2424 = vmax.f32 %v2422, %v2423
        %v2425 = vrot.slane %v2424, 2
        %v2426 = vmax.f32 %v2424, %v2425
        %v2427 = vrot.slane %v2426, 1
        %v2428 = vmax.f32 %v2426, %v2427
        %v2429 = vsel %vm2330, %v2280, -inf
        %v2430 = vrot.slane %v2429, 4
        %v2431 = vmax.f32 %v2429, %v2430
        %v2432 = vrot.slane %v2431, 2
        %v2433 = vmax.f32 %v2431, %v2432
        %v2434 = vrot.slane %v2433, 1
        %v2435 = vmax.f32 %v2433, %v2434
        %v2436 = vsel %vm2330, %v2281, -inf
        %v2437 = vrot.slane %v2436, 4
        %v2438 = vmax.f32 %v2436, %v2437
        %v2439 = vrot.slane %v2438, 2
        %v2440 = vmax.f32 %v2438, %v2439
        %v2441 = vrot.slane %v2440, 1
        %v2442 = vmax.f32 %v2440, %v2441
        %v2443 = vsel %vm2330, %v2282, -inf
        %v2444 = vrot.slane %v2443, 4
        %v2445 = vmax.f32 %v2443, %v2444
        %v2446 = vrot.slane %v2445, 2
        %v2447 = vmax.f32 %v2445, %v2446
        %v2448 = vrot.slane %v2447, 1
        %v2449 = vmax.f32 %v2447, %v2448
        %v2450 = vsel %vm2330, %v2283, -inf
        %v2451 = vrot.slane %v2450, 4
        %v2452 = vmax.f32 %v2450, %v2451
        %v2453 = vrot.slane %v2452, 2
        %v2454 = vmax.f32 %v2452, %v2453
        %v2455 = vrot.slane %v2454, 1
        %v2456 = vmax.f32 %v2454, %v2455
        %v2457 = vsel %vm2330, %v2284, -inf
        %v2458 = vrot.slane %v2457, 4
        %v2459 = vmax.f32 %v2457, %v2458
        %v2460 = vrot.slane %v2459, 2
        %v2461 = vmax.f32 %v2459, %v2460
        %v2462 = vrot.slane %v2461, 1
        %v2463 = vmax.f32 %v2461, %v2462
        %v2464 = vsel %vm2330, %v2285, -inf
        %v2465 = vrot.slane %v2464, 4
        %v2466 = vmax.f32 %v2464, %v2465
        %v2467 = vrot.slane %v2466, 2
        %v2468 = vmax.f32 %v2466, %v2467
        %v2469 = vrot.slane %v2468, 1
        %v2470 = vmax.f32 %v2468, %v2469
        %v2471 = vsel %vm2330, %v2286, -inf
        %v2472 = vrot.slane %v2471, 4
        %v2473 = vmax.f32 %v2471, %v2472
        %v2474 = vrot.slane %v2473, 2
        %v2475 = vmax.f32 %v2473, %v2474
        %v2476 = vrot.slane %v2475, 1
        %v2477 = vmax.f32 %v2475, %v2476
        %v2478 = vsel %vm2330, %v2287, -inf
        %v2479 = vrot.slane %v2478, 4
        %v2480 = vmax.f32 %v2478, %v2479
        %v2481 = vrot.slane %v2480, 2
        %v2482 = vmax.f32 %v2480, %v2481
        %v2483 = vrot.slane %v2482, 1
        %v2484 = vmax.f32 %v2482, %v2483
        %v2485 = vsel %vm2330, %v2288, -inf
        %v2486 = vrot.slane %v2485, 4
        %v2487 = vmax.f32 %v2485, %v2486
        %v2488 = vrot.slane %v2487, 2
        %v2489 = vmax.f32 %v2487, %v2488
        %v2490 = vrot.slane %v2489, 1
        %v2491 = vmax.f32 %v2489, %v2490
        %v2492 = vsel %vm2330, %v2289, -inf
        %v2493 = vrot.slane %v2492, 4
        %v2494 = vmax.f32 %v2492, %v2493
        %v2495 = vrot.slane %v2494, 2
        %v2496 = vmax.f32 %v2494, %v2495
        %v2497 = vrot.slane %v2496, 1
        %v2498 = vmax.f32 %v2496, %v2497
        %v2499 = vsel %vm2330, %v2290, -inf
        %v2500 = vrot.slane %v2499, 4
        %v2501 = vmax.f32 %v2499, %v2500
        %v2502 = vrot.slane %v2501, 2
        %v2503 = vmax.f32 %v2501, %v2502
        %v2504 = vrot.slane %v2503, 1
        %v2505 = vmax.f32 %v2503, %v2504
        %v2506 = vsel %vm2330, %v2291, -inf
        %v2507 = vrot.slane %v2506, 4
        %v2508 = vmax.f32 %v2506, %v2507
        %v2509 = vrot.slane %v2508, 2
        %v2510 = vmax.f32 %v2508, %v2509
        %v2511 = vrot.slane %v2510, 1
        %v2512 = vmax.f32 %v2510, %v2511
        %v2513 = vsel %vm2330, %v2292, -inf
        %v2514 = vrot.slane %v2513, 4
        %v2515 = vmax.f32 %v2513, %v2514
        %v2516 = vrot.slane %v2515, 2
        %v2517 = vmax.f32 %v2515, %v2516
        %v2518 = vrot.slane %v2517, 1
        %v2519 = vmax.f32 %v2517, %v2518
        %v2520 = vsel %vm2330, %v2293, -inf
        %v2521 = vrot.slane %v2520, 4
        %v2522 = vmax.f32 %v2520, %v2521
        %v2523 = vrot.slane %v2522, 2
        %v2524 = vmax.f32 %v2522, %v2523
        %v2525 = vrot.slane %v2524, 1
        %v2526 = vmax.f32 %v2524, %v2525
        %v2527 = vsel %vm2330, %v2294, -inf
        %v2528 = vrot.slane %v2527, 4
        %v2529 = vmax.f32 %v2527, %v2528
        %v2530 = vrot.slane %v2529, 2
        %v2531 = vmax.f32 %v2529, %v2530
        %v2532 = vrot.slane %v2531, 1
        %v2533 = vmax.f32 %v2531, %v2532
        %v2534 = vsel %vm2330, %v2295, -inf
        %v2535 = vrot.slane %v2534, 4
        %v2536 = vmax.f32 %v2534, %v2535
        %v2537 = vrot.slane %v2536, 2
        %v2538 = vmax.f32 %v2536, %v2537
        %v2539 = vrot.slane %v2538, 1
        %v2540 = vmax.f32 %v2538, %v2539
        %v2541 = vsel %vm2330, %v2296, -inf
        %v2542 = vrot.slane %v2541, 4
        %v2543 = vmax.f32 %v2541, %v2542
        %v2544 = vrot.slane %v2543, 2
        %v2545 = vmax.f32 %v2543, %v2544
        %v2546 = vrot.slane %v2545, 1
        %v2547 = vmax.f32 %v2545, %v2546
        %v2548 = vsel %vm2330, %v2297, -inf
        %v2549 = vrot.slane %v2548, 4
        %v2550 = vmax.f32 %v2548, %v2549
        %v2551 = vrot.slane %v2550, 2
        %v2552 = vmax.f32 %v2550, %v2551
        %v2553 = vrot.slane %v2552, 1
        %v2554 = vmax.f32 %v2552, %v2553
        %v2555 = vsel %vm2330, %v2298, -inf
        %v2556 = vrot.slane %v2555, 4
        %v2557 = vmax.f32 %v2555, %v2556
        %v2558 = vrot.slane %v2557, 2
        %v2559 = vmax.f32 %v2557, %v2558
        %v2560 = vrot.slane %v2559, 1
        %v2561 = vmax.f32 %v2559, %v2560
        %v2562 = vsel %vm2330, %v2299, -inf
        %v2563 = vrot.slane %v2562, 4
        %v2564 = vmax.f32 %v2562, %v2563
        %v2565 = vrot.slane %v2564, 2
        %v2566 = vmax.f32 %v2564, %v2565
        %v2567 = vrot.slane %v2566, 1
        %v2568 = vmax.f32 %v2566, %v2567
        %v2569 = vsel %vm2330, %v2300, -inf
        %v2570 = vrot.slane %v2569, 4
        %v2571 = vmax.f32 %v2569, %v2570
        %v2572 = vrot.slane %v2571, 2
        %v2573 = vmax.f32 %v2571, %v2572
        %v2574 = vrot.slane %v2573, 1
        %v2575 = vmax.f32 %v2573, %v2574
        %v2576 = vsel %vm2330, %v2301, -inf
        %v2577 = vrot.slane %v2576, 4
        %v2578 = vmax.f32 %v2576, %v2577
        %v2579 = vrot.slane %v2578, 2
        %v2580 = vmax.f32 %v2578, %v2579
        %v2581 = vrot.slane %v2580, 1
        %v2582 = vmax.f32 %v2580, %v2581
        %v2583 = vsel %vm2330, %v2302, -inf
        %v2584 = vrot.slane %v2583, 4
        %v2585 = vmax.f32 %v2583, %v2584
        %v2586 = vrot.slane %v2585, 2
        %v2587 = vmax.f32 %v2585, %v2586
        %v2588 = vrot.slane %v2587, 1
        %v2589 = vmax.f32 %v2587, %v2588
        %v2590 = vsel %vm2330, %v2303, -inf
        %v2591 = vrot.slane %v2590, 4
        %v2592 = vmax.f32 %v2590, %v2591
        %v2593 = vrot.slane %v2592, 2
        %v2594 = vmax.f32 %v2592, %v2593
        %v2595 = vrot.slane %v2594, 1
        %v2596 = vmax.f32 %v2594, %v2595
        %v2597 = vsel %vm2330, %v2304, -inf
        %v2598 = vrot.slane %v2597, 4
        %v2599 = vmax.f32 %v2597, %v2598
        %v2600 = vrot.slane %v2599, 2
        %v2601 = vmax.f32 %v2599, %v2600
        %v2602 = vrot.slane %v2601, 1
        %v2603 = vmax.f32 %v2601, %v2602
        %v2604 = vsel %vm2330, %v2305, -inf
        %v2605 = vrot.slane %v2604, 4
        %v2606 = vmax.f32 %v2604, %v2605
        %v2607 = vrot.slane %v2606, 2
        %v2608 = vmax.f32 %v2606, %v2607
        %v2609 = vrot.slane %v2608, 1
        %v2610 = vmax.f32 %v2608, %v2609
        %v2611 = vsel %vm2330, %v2306, -inf
        %v2612 = vrot.slane %v2611, 4
        %v2613 = vmax.f32 %v2611, %v2612
        %v2614 = vrot.slane %v2613, 2
        %v2615 = vmax.f32 %v2613, %v2614
        %v2616 = vrot.slane %v2615, 1
        %v2617 = vmax.f32 %v2615, %v2616
        %v2618 = vsel %vm2330, %v2307, -inf
        %v2619 = vrot.slane %v2618, 4
        %v2620 = vmax.f32 %v2618, %v2619
        %v2621 = vrot.slane %v2620, 2
        %v2622 = vmax.f32 %v2620, %v2621
        %v2623 = vrot.slane %v2622, 1
        %v2624 = vmax.f32 %v2622, %v2623
        %v2625 = vsel %vm2330, %v2308, -inf
        %v2626 = vrot.slane %v2625, 4
        %v2627 = vmax.f32 %v2625, %v2626
        %v2628 = vrot.slane %v2627, 2
        %v2629 = vmax.f32 %v2627, %v2628
        %v2630 = vrot.slane %v2629, 1
        %v2631 = vmax.f32 %v2629, %v2630
        %v2632 = vsel %vm2330, %v2309, -inf
        %v2633 = vrot.slane %v2632, 4
        %v2634 = vmax.f32 %v2632, %v2633
        %v2635 = vrot.slane %v2634, 2
        %v2636 = vmax.f32 %v2634, %v2635
        %v2637 = vrot.slane %v2636, 1
        %v2638 = vmax.f32 %v2636, %v2637
        %v2639 = vsel %vm2330, %v2310, -inf
        %v2640 = vrot.slane %v2639, 4
        %v2641 = vmax.f32 %v2639, %v2640
        %v2642 = vrot.slane %v2641, 2
        %v2643 = vmax.f32 %v2641, %v2642
        %v2644 = vrot.slane %v2643, 1
        %v2645 = vmax.f32 %v2643, %v2644
        %v2646 = vsel %vm2330, %v2311, -inf
        %v2647 = vrot.slane %v2646, 4
        %v2648 = vmax.f32 %v2646, %v2647
        %v2649 = vrot.slane %v2648, 2
        %v2650 = vmax.f32 %v2648, %v2649
        %v2651 = vrot.slane %v2650, 1
        %v2652 = vmax.f32 %v2650, %v2651
        %v2653 = vsel %vm2330, %v2312, -inf
        %v2654 = vrot.slane %v2653, 4
        %v2655 = vmax.f32 %v2653, %v2654
        %v2656 = vrot.slane %v2655, 2
        %v2657 = vmax.f32 %v2655, %v2656
        %v2658 = vrot.slane %v2657, 1
        %v2659 = vmax.f32 %v2657, %v2658
        %v2660 = vsel %vm2330, %v2313, -inf
        %v2661 = vrot.slane %v2660, 4
        %v2662 = vmax.f32 %v2660, %v2661
        %v2663 = vrot.slane %v2662, 2
        %v2664 = vmax.f32 %v2662, %v2663
        %v2665 = vrot.slane %v2664, 1
        %v2666 = vmax.f32 %v2664, %v2665
        %v2667 = vsel %vm2330, %v2314, -inf
        %v2668 = vrot.slane %v2667, 4
        %v2669 = vmax.f32 %v2667, %v2668
        %v2670 = vrot.slane %v2669, 2
        %v2671 = vmax.f32 %v2669, %v2670
        %v2672 = vrot.slane %v2671, 1
        %v2673 = vmax.f32 %v2671, %v2672
        %v2674 = vsel %vm2330, %v2315, -inf
        %v2675 = vrot.slane %v2674, 4
        %v2676 = vmax.f32 %v2674, %v2675
        %v2677 = vrot.slane %v2676, 2
        %v2678 = vmax.f32 %v2676, %v2677
        %v2679 = vrot.slane %v2678, 1
        %v2680 = vmax.f32 %v2678, %v2679
        %v2681 = vsel %vm2330, %v2316, -inf
        %v2682 = vrot.slane %v2681, 4
        %v2683 = vmax.f32 %v2681, %v2682
        %v2684 = vrot.slane %v2683, 2
        %v2685 = vmax.f32 %v2683, %v2684
        %v2686 = vrot.slane %v2685, 1
        %v2687 = vmax.f32 %v2685, %v2686
        %v2688 = vsel %vm2330, %v2317, -inf
        %v2689 = vrot.slane %v2688, 4
        %v2690 = vmax.f32 %v2688, %v2689
        %v2691 = vrot.slane %v2690, 2
        %v2692 = vmax.f32 %v2690, %v2691
        %v2693 = vrot.slane %v2692, 1
        %v2694 = vmax.f32 %v2692, %v2693
        %v2695 = vsel %vm2330, %v2318, -inf
        %v2696 = vrot.slane %v2695, 4
        %v2697 = vmax.f32 %v2695, %v2696
        %v2698 = vrot.slane %v2697, 2
        %v2699 = vmax.f32 %v2697, %v2698
        %v2700 = vrot.slane %v2699, 1
        %v2701 = vmax.f32 %v2699, %v2700
        %v2702 = vsel %vm2330, %v2319, -inf
        %v2703 = vrot.slane %v2702, 4
        %v2704 = vmax.f32 %v2702, %v2703
        %v2705 = vrot.slane %v2704, 2
        %v2706 = vmax.f32 %v2704, %v2705
        %v2707 = vrot.slane %v2706, 1
        %v2708 = vmax.f32 %v2706, %v2707
        %v2709 = vsel %vm2330, %v2320, -inf
        %v2710 = vrot.slane %v2709, 4
        %v2711 = vmax.f32 %v2709, %v2710
        %v2712 = vrot.slane %v2711, 2
        %v2713 = vmax.f32 %v2711, %v2712
        %v2714 = vrot.slane %v2713, 1
        %v2715 = vmax.f32 %v2713, %v2714
        %v2716 = vsel %vm2330, %v2321, -inf
        %v2717 = vrot.slane %v2716, 4
        %v2718 = vmax.f32 %v2716, %v2717
        %v2719 = vrot.slane %v2718, 2
        %v2720 = vmax.f32 %v2718, %v2719
        %v2721 = vrot.slane %v2720, 1
        %v2722 = vmax.f32 %v2720, %v2721
        %v2723 = vsel %vm2330, %v2322, -inf
        %v2724 = vrot.slane %v2723, 4
        %v2725 = vmax.f32 %v2723, %v2724
        %v2726 = vrot.slane %v2725, 2
        %v2727 = vmax.f32 %v2725, %v2726
        %v2728 = vrot.slane %v2727, 1
        %v2729 = vmax.f32 %v2727, %v2728
        %v2730 = vsel %vm2330, %v2323, -inf
        %v2731 = vrot.slane %v2730, 4
        %v2732 = vmax.f32 %v2730, %v2731
        %v2733 = vrot.slane %v2732, 2
        %v2734 = vmax.f32 %v2732, %v2733
        %v2735 = vrot.slane %v2734, 1
        %v2736 = vmax.f32 %v2734, %v2735
        %v2737 = vsel %vm2330, %v2324, -inf
        %v2738 = vrot.slane %v2737, 4
        %v2739 = vmax.f32 %v2737, %v2738
        %v2740 = vrot.slane %v2739, 2
        %v2741 = vmax.f32 %v2739, %v2740
        %v2742 = vrot.slane %v2741, 1
        %v2743 = vmax.f32 %v2741, %v2742
        %v2744 = vsel %vm2330, %v2325, -inf
        %v2745 = vrot.slane %v2744, 4
        %v2746 = vmax.f32 %v2744, %v2745
        %v2747 = vrot.slane %v2746, 2
        %v2748 = vmax.f32 %v2746, %v2747
        %v2749 = vrot.slane %v2748, 1
        %v2750 = vmax.f32 %v2748, %v2749
        %v2751 = vsel %vm2330, %v2326, -inf
        %v2752 = vrot.slane %v2751, 4
        %v2753 = vmax.f32 %v2751, %v2752
        %v2754 = vrot.slane %v2753, 2
        %v2755 = vmax.f32 %v2753, %v2754
        %v2756 = vrot.slane %v2755, 1
        %v2757 = vmax.f32 %v2755, %v2756
        %v2758 = vsel %vm2330, %v2327, -inf
        %v2759 = vrot.slane %v2758, 4
        %v2760 = vmax.f32 %v2758, %v2759
        %v2761 = vrot.slane %v2760, 2
        %v2762 = vmax.f32 %v2760, %v2761
        %v2763 = vrot.slane %v2762, 1
        %v2764 = vmax.f32 %v2762, %v2763
        %v2765 = vsel %vm2330, %v2328, -inf
        %v2766 = vrot.slane %v2765, 4
        %v2767 = vmax.f32 %v2765, %v2766
        %v2768 = vrot.slane %v2767, 2
        %v2769 = vmax.f32 %v2767, %v2768
        %v2770 = vrot.slane %v2769, 1
        %v2771 = vmax.f32 %v2769, %v2770
        %v2772 = vsel %vm2330, %v2329, -inf
        %v2773 = vrot.slane %v2772, 4
        %v2774 = vmax.f32 %v2772, %v2773
        %v2775 = vrot.slane %v2774, 2
        %v2776 = vmax.f32 %v2774, %v2775
        %v2777 = vrot.slane %v2776, 1
        %v2778 = vmax.f32 %v2776, %v2777
        %vm2843 = vcmask 1041409
        %v2844 = vsel %vm2843, %v2344, %v2337
        %vm2845 = vcmask 1042434
        %v2846 = vsel %vm2845, %v2351, %v2844
        %vm2847 = vcmask 1043459
        %v2848 = vsel %vm2847, %v2358, %v2846
        %vm2849 = vcmask 1044484
        %v2850 = vsel %vm2849, %v2365, %v2848
        %vm2851 = vcmask 1045509
        %v2852 = vsel %vm2851, %v2372, %v2850
        %vm2853 = vcmask 1046534
        %v2854 = vsel %vm2853, %v2379, %v2852
        %vm2855 = vcmask 1047559
        %v2856 = vsel %vm2855, %v2386, %v2854
        %v2857 = vsel %vm2843, %v2400, %v2393
        %v2858 = vsel %vm2845, %v2407, %v2857
        %v2859 = vsel %vm2847, %v2414, %v2858
        %v2860 = vsel %vm2849, %v2421, %v2859
        %v2861 = vsel %vm2851, %v2428, %v2860
        %v2862 = vsel %vm2853, %v2435, %v2861
        %v2863 = vsel %vm2855, %v2442, %v2862
        %v2864 = vsel %vm2843, %v2456, %v2449
        %v2865 = vsel %vm2845, %v2463, %v2864
        %v2866 = vsel %vm2847, %v2470, %v2865
        %v2867 = vsel %vm2849, %v2477, %v2866
        %v2868 = vsel %vm2851, %v2484, %v2867
        %v2869 = vsel %vm2853, %v2491, %v2868
        %v2870 = vsel %vm2855, %v2498, %v2869
        %v2871 = vsel %vm2843, %v2512, %v2505
        %v2872 = vsel %vm2845, %v2519, %v2871
        %v2873 = vsel %vm2847, %v2526, %v2872
        %v2874 = vsel %vm2849, %v2533, %v2873
        %v2875 = vsel %vm2851, %v2540, %v2874
        %v2876 = vsel %vm2853, %v2547, %v2875
        %v2877 = vsel %vm2855, %v2554, %v2876
        %v2878 = vsel %vm2843, %v2568, %v2561
        %v2879 = vsel %vm2845, %v2575, %v2878
        %v2880 = vsel %vm2847, %v2582, %v2879
        %v2881 = vsel %vm2849, %v2589, %v2880
        %v2882 = vsel %vm2851, %v2596, %v2881
        %v2883 = vsel %vm2853, %v2603, %v2882
        %v2884 = vsel %vm2855, %v2610, %v2883
        %v2885 = vsel %vm2843, %v2624, %v2617
        %v2886 = vsel %vm2845, %v2631, %v2885
        %v2887 = vsel %vm2847, %v2638, %v2886
        %v2888 = vsel %vm2849, %v2645, %v2887
        %v2889 = vsel %vm2851, %v2652, %v2888
        %v2890 = vsel %vm2853, %v2659, %v2889
        %v2891 = vsel %vm2855, %v2666, %v2890
        %v2892 = vsel %vm2843, %v2680, %v2673
        %v2893 = vsel %vm2845, %v2687, %v2892
        %v2894 = vsel %vm2847, %v2694, %v2893
        %v2895 = vsel %vm2849, %v2701, %v2894
        %v2896 = vsel %vm2851, %v2708, %v2895
        %v2897 = vsel %vm2853, %v2715, %v2896
        %v2898 = vsel %vm2855, %v2722, %v2897
        %v2899 = vsel %vm2843, %v2736, %v2729
        %v2900 = vsel %vm2845, %v2743, %v2899
        %v2901 = vsel %vm2847, %v2750, %v2900
        %v2902 = vsel %vm2849, %v2757, %v2901
        %v2903 = vsel %vm2851, %v2764, %v2902
        %v2904 = vsel %vm2853, %v2771, %v2903
        %v2905 = vsel %vm2855, %v2778, %v2904
        %v2914 = vcombine.low %v2856, %v2870
        %v2915 = vcombine.high %v2856, %v2870
        %v2917 = vunpack.c.l.s4 1983009808
        %v2918 = vunpack.c.0.s8 %v2917
        %v2919 = vlaneseq
        %v2920 = vshrl.u32 %v2919, 7
        %v2921 = vsub.s32 %v2918, %v2920
        %v2922 = vrot.slane %v2914, %v2921
        %v2924 = vunpack.c.l.s4 1983009808
        %v2925 = vunpack.c.0.s8 %v2924
        %v2926 = vlaneseq
        %v2927 = vshrl.u32 %v2926, 7
        %v2928 = vsub.s32 %v2925, %v2927
        %v2929 = vrot.slane %v2915, %v2928
        %v2930 = vcombine.low %v2863, %v2877
        %v2931 = vcombine.high %v2863, %v2877
        %v2933 = vunpack.c.l.s4 1983009808
        %v2934 = vunpack.c.0.s8 %v2933
        %v2935 = vlaneseq
        %v2936 = vshrl.u32 %v2935, 7
        %v2937 = vsub.s32 %v2934, %v2936
        %v2938 = vrot.slane %v2930, %v2937
        %v2940 = vunpack.c.l.s4 1983009808
        %v2941 = vunpack.c.0.s8 %v2940
        %v2942 = vlaneseq
        %v2943 = vshrl.u32 %v2942, 7
        %v2944 = vsub.s32 %v2941, %v2943
        %v2945 = vrot.slane %v2931, %v2944
        %v2946 = vcombine.low %v2884, %v2898
        %v2947 = vcombine.high %v2884, %v2898
        %v2949 = vunpack.c.l.s4 1983009808
        %v2950 = vunpack.c.0.s8 %v2949
        %v2951 = vlaneseq
        %v2952 = vshrl.u32 %v2951, 7
        %v2953 = vsub.s32 %v2950, %v2952
        %v2954 = vrot.slane %v2946, %v2953
        %v2956 = vunpack.c.l.s4 1983009808
        %v2957 = vunpack.c.0.s8 %v2956
        %v2958 = vlaneseq
        %v2959 = vshrl.u32 %v2958, 7
        %v2960 = vsub.s32 %v2957, %v2959
        %v2961 = vrot.slane %v2947, %v2960
        %v2962 = vcombine.low %v2891, %v2905
        %v2963 = vcombine.high %v2891, %v2905
        %v2965 = vunpack.c.l.s4 1983009808
        %v2966 = vunpack.c.0.s8 %v2965
        %v2967 = vlaneseq
        %v2968 = vshrl.u32 %v2967, 7
        %v2969 = vsub.s32 %v2966, %v2968
        %v2970 = vrot.slane %v2962, %v2969
        %v2972 = vunpack.c.l.s4 1983009808
        %v2973 = vunpack.c.0.s8 %v2972
        %v2974 = vlaneseq
        %v2975 = vshrl.u32 %v2974, 7
        %v2976 = vsub.s32 %v2973, %v2975
        %v2977 = vrot.slane %v2963, %v2976
        %v2978 = vcombine.low %v2922, %v2938
        %v2979 = vcombine.high %v2922, %v2938
        %v2981 = vunpack.c.l.s4 1934713408
        %v2982 = vunpack.c.0.s8 %v2981
        %v2983 = vlaneseq
        %v2984 = vshrl.u32 %v2983, 7
        %v2985 = vsub.s32 %v2982, %v2984
        %v2986 = vrot.slane %v2978, %v2985
        %v2988 = vunpack.c.l.s4 1934713408
        %v2989 = vunpack.c.0.s8 %v2988
        %v2990 = vlaneseq
        %v2991 = vshrl.u32 %v2990, 7
        %v2992 = vsub.s32 %v2989, %v2991
        %v2993 = vrot.slane %v2979, %v2992
        %v2994 = vcombine.low %v2929, %v2945
        %v2995 = vcombine.high %v2929, %v2945
        %v2997 = vunpack.c.l.s4 1934713408
        %v2998 = vunpack.c.0.s8 %v2997
        %v2999 = vlaneseq
        %v3000 = vshrl.u32 %v2999, 7
        %v3001 = vsub.s32 %v2998, %v3000
        %v3002 = vrot.slane %v2994, %v3001
        %v3004 = vunpack.c.l.s4 1934713408
        %v3005 = vunpack.c.0.s8 %v3004
        %v3006 = vlaneseq
        %v3007 = vshrl.u32 %v3006, 7
        %v3008 = vsub.s32 %v3005, %v3007
        %v3009 = vrot.slane %v2995, %v3008
        %v3010 = vcombine.low %v2954, %v2970
        %v3011 = vcombine.high %v2954, %v2970
        %v3013 = vunpack.c.l.s4 1934713408
        %v3014 = vunpack.c.0.s8 %v3013
        %v3015 = vlaneseq
        %v3016 = vshrl.u32 %v3015, 7
        %v3017 = vsub.s32 %v3014, %v3016
        %v3018 = vrot.slane %v3010, %v3017
        %v3020 = vunpack.c.l.s4 1934713408
        %v3021 = vunpack.c.0.s8 %v3020
        %v3022 = vlaneseq
        %v3023 = vshrl.u32 %v3022, 7
        %v3024 = vsub.s32 %v3021, %v3023
        %v3025 = vrot.slane %v3011, %v3024
        %v3026 = vcombine.low %v2961, %v2977
        %v3027 = vcombine.high %v2961, %v2977
        %v3029 = vunpack.c.l.s4 1934713408
        %v3030 = vunpack.c.0.s8 %v3029
        %v3031 = vlaneseq
        %v3032 = vshrl.u32 %v3031, 7
        %v3033 = vsub.s32 %v3030, %v3032
        %v3034 = vrot.slane %v3026, %v3033
        %v3036 = vunpack.c.l.s4 1934713408
        %v3037 = vunpack.c.0.s8 %v3036
        %v3038 = vlaneseq
        %v3039 = vshrl.u32 %v3038, 7
        %v3040 = vsub.s32 %v3037, %v3039
        %v3041 = vrot.slane %v3027, %v3040
        %v3042 = vcombine.low %v2986, %v3018
        %v3043 = vcombine.high %v2986, %v3018
        %v3044 = vcombine.low %v2993, %v3025
        %v3045 = vcombine.high %v2993, %v3025
        %v3046 = vcombine.low %v3002, %v3034
        %v3047 = vcombine.high %v3002, %v3034
        %v3048 = vcombine.low %v3009, %v3041
        %v3049 = vcombine.high %v3009, %v3041
        %3051 = vrot.lane.b32.xlu0 %v3043, 64
        %v3052 = vpop.permute.xlu0 %3051
        %3055 = vrot.lane.b32.xlu0 %v3045, 64
        %v3056 = vpop.permute.xlu0 %3055
        %3059 = vrot.lane.b32.xlu0 %v3047, 64
        %v3060 = vpop.permute.xlu0 %3059
        %3063 = vrot.lane.b32.xlu0 %v3049, 64
        %v3064 = vpop.permute.xlu0 %3063
        %vm3066 = vcmask 523264
        %v3067 = vsel %vm3066, %v3042, %v3052
        %v3068 = vsel %vm3066, %v3044, %v3056
        %v3069 = vsel %vm3066, %v3046, %v3060
        %v3070 = vsel %vm3066, %v3048, %v3064
        %v3071 = vpack.c.bf16 %v3067, %v3067
        %v3072 = vpack.c.bf16 %v3068, %v3068
        %v3073 = vpack.c.bf16 %v3069, %v3069
        %v3074 = vpack.c.bf16 %v3070, %v3070
        %v3079 = vunpack.c.l.b16 %v3071
        %v3080 = vunpack.c.l.b16 %v3072
        %v3081 = vunpack.c.l.b16 %v3073
        %v3082 = vunpack.c.l.b16 %v3074
        %v3083 = vpack.c.b16 %v3080, %v3079
        %v3084 = vpack.c.b16 %v3082, %v3081
        %3087 = vst [vmem:[%s269] sm:$0xff] %v3083
        %3088 = vst [vmem:[%s269 + $0x8] sm:$0xff] %v3084
        %s3089 = sand.u32 %s134, 1
        %s3090 = scalar_lea.sflag [#allocation4], %s3089
        %s3091 = sand.u32 %s134, 1
        %s3092 = smul.addr %s3091, 16
        %s3093 = scalar_lea.vmem [#allocation10], %s3092
        // Predicated region
        $region53: #{tpu_custom_call.1} parent=35 // pred_check
          %p3094 = pneg %p144
        $region54: #{tpu_custom_call.1} parent=35 // pred_check_branch
          %3096 = sbr.rel (%p3094) target = $region56
        $region55: #{tpu_custom_call.1} parent=35 // pred_region
          %s3098 = ssub.s32 256, 256
          %3099 = vsyncadd %s3090, %s3098
          %s3100 = smul.addr %s28, 4
          %s3101 = smul.addr %s27, 4
          %s3102 = sadd.s32 %s3100, %s3101
          %s3103 = smul.addr %s3102, 64
          %s3104 = scalar_lea.hbm %s4, %s3103
          %s3106 = sshll.u32 %s3093, 4
          %s3107 = int_to_ptr.vmem [resolvable:$true] %s3106
          %3109 = dma.vmem_to_hbm [thread:$0]  %s3107, 256, %s3104, %s3090
        $region56: #{tpu_custom_call.1} parent=35 // pred_fallthru
          _
      $region36: #{tpu_custom_call.1} parent=5 // pred_fallthru
        _
      %p3110 = scmp.le.s32.totalorder 2, %s18
      // Predicated region
      $region57: #{tpu_custom_call.1} parent=5 // pred_check
        %p3111 = pneg %p3110
      $region58: #{tpu_custom_call.1} parent=5 // pred_check_branch
        %3113 = sbr.rel (%p3111) target = $region60
      $region59: #{tpu_custom_call.1} parent=5 // pred_region
        %s3114 = ssub.s32 %s18, 2
        // Predicated region
        $region61: #{tpu_custom_call.1} parent=59 // pred_check
          %p3115 = pneg %p150
        $region62: #{tpu_custom_call.1} parent=59 // pred_check_branch
          %3117 = sbr.rel (%p3115) target = $region64
        $region63: #{tpu_custom_call.1} parent=59 // pred_region
          %s3118 = sand.u32 %s135, 1
          %s3119 = scalar_lea.sflag [#allocation4], %s3118
          %s3120 = sand.u32 %s135, 1
          %s3121 = smul.addr %s3120, 16
          %s3122 = scalar_lea.vmem [#allocation10], %s3121
          %3123 = dma.done %s3119, 256
        $region64: #{tpu_custom_call.1} parent=59 // pred_fallthru
          _
      $region60: #{tpu_custom_call.1} parent=5 // pred_fallthru
        _
    $region6: #{tpu_custom_call.1} parent=1 // loop_footer
      %s22 = sadd.s32 1, %s18
    $region7: #{tpu_custom_call.1} parent=1 // loop_footer_branch
      %17 = sbr.rel target = $region3
    $region8: #{tpu_custom_call.1} parent=1 // loop_exit
      _
    %3124 = vsyncpa [#allocation3], 1
    %s3125 = scalar_lea.sflag [#allocation3], 1
    %3126 = vsyncpa %s3125, 1
    %3127 = vsyncpa [#allocation6], 1
    %3128 = vsyncpa [#allocation9], 1
    %3129 = vsyncpa [#allocation4], 1
    %s3130 = scalar_lea.sflag [#allocation4], 1
    %3131 = vsyncpa %s3130, 1

</llo_original>
